<compile_context>
chip_gen: v6e
topology: v6e:2x2x1
jax: 0.10.0
libtpu: 0.0.40
codegen_flags: <defaults>
</compile_context>

<pallas_src>
import functools

import numpy as np
import jax
import jax.numpy as jnp
from jax import lax
from jax.experimental import pallas as pl
from jax.experimental.pallas import tpu as pltpu


# ------------------------------ Pallas kernel ------------------------------ #

def _node_gru_kernel(atom_ref, frag_ref, wx_ref, bx_ref, wh_ref, wp_ref, bp_ref,
                     out_ref, *, B, T_atom, T_frag):
    """Fused Node_GRU forward (4 GRU directions + projection in one body).

    atom_ref : (T_atom*B, H)  time-major rows (row index = t*B + b)
    frag_ref : (T_frag*B, H)
    wx_ref   : (4, H, 16H)  per-direction input weights scattered into that
               direction's lanes of the combined gate layout [R|Z|NI|NH]
               (each group 4H wide; direction d occupies lanes d*H:(d+1)*H).
    bx_ref   : (4, 1, 16H)  folded biases in the same scattered layout
               (R: b_ir+b_hr, Z: b_iz+b_hz, NI: b_in, NH: b_hn).
    wh_ref   : (4H, 16H)    block-diagonal recurrent weights for the combined
               hidden state [h_atom_fwd | h_atom_bwd | h_frag_fwd | h_frag_bwd].
    wp_ref   : (4H, H)      projection weight (already transposed)
    bp_ref   : (1, H)       projection bias
    out_ref  : (B, H)
    """
    H = wp_ref.shape[1]
    HC = 4 * H                  # combined hidden width (4 directions)
    cd = wh_ref.dtype           # MXU operand dtype (bf16 fast path / f32 exact)
    T_max = max(T_atom, T_frag)
    dt_a = T_max - T_atom       # step at which the atom forward chain starts
    dt_f = T_max - T_frag       # step at which the frag forward chain starts

    atom = atom_ref[...].astype(cd)
    frag = frag_ref[...].astype(cd)

    # Hoisted input-side matmuls: one MXU pass per sequence (+ one tiny pass per
    # reverse direction), entirely OFF the recurrent critical path.  Biases are
    # pre-folded, so the recurrence below never touches them.
    gxa = jnp.dot(atom, wx_ref[0], preferred_element_type=jnp.float32) + bx_ref[0]
    gxf = jnp.dot(frag, wx_ref[2], preferred_element_type=jnp.float32) + bx_ref[2]
    # Reverse-direction part of out[:, -1, :] is ONE GRU step on the last element
    # from h0 = 0, so only its input-side gates are needed, once.
    gab = jnp.dot(atom[(T_atom - 1) * B:, :], wx_ref[1],
                  preferred_element_type=jnp.float32) + bx_ref[1]
    gfb = jnp.dot(frag[(T_frag - 1) * B:, :], wx_ref[3],
                  preferred_element_type=jnp.float32) + bx_ref[3]

    # Per-step combined input-side gates (B, 16H).  A direction whose slice is
    # all-zero stays exactly at h = 0 (sigmoid(0)=0.5, tanh(0)=0 -> h_new = 0),
    # so shorter / backward chains simply switch on at the correct step.
    gx_steps = []
    for t in range(T_max):
        g = None
        if t >= dt_a:
            ga = gxa[(t - dt_a) * B:(t - dt_a + 1) * B, :]
            g = ga if g is None else g + ga
        if t >= dt_f:
            gf = gxf[(t - dt_f) * B:(t - dt_f + 1) * B, :]
            g = gf if g is None else g + gf
        if t == T_max - 1:
            g = g + gab + gfb
        gx_steps.append(g)

    # Fused recurrence: all four GRU directions advance on ONE MXU push per step
    # (block-diagonal wh).  Static unroll keeps h in vregs; every gate slice is
    # at a 4H = 128-lane boundary -> no per-step lane relayouts; the final h IS
    # the (B, 4H) embed in PyTorch order (no concatenate needed).
    wh = wh_ref[...]
    h = jnp.zeros((B, HC), jnp.float32)
    for t in range(T_max):
        g = gx_steps[t] + jnp.dot(h.astype(cd), wh,
                                  preferred_element_type=jnp.float32)
        r = jax.nn.sigmoid(g[:, :HC])
        z = jax.nn.sigmoid(g[:, HC:2 * HC])
        n = jnp.tanh(g[:, 2 * HC:3 * HC] + r * g[:, 3 * HC:])
        h = (1.0 - z) * n + z * h

    # Fused projection on the already lane-ordered embed.
    out = jnp.dot(h.astype(cd), wp_ref[...],
                  preferred_element_type=jnp.float32) + bp_ref[...]
    out_ref[...] = out.astype(out_ref.dtype)


# --------------------------------- wrapper ---------------------------------- #

def _pack_params(params, compute_dtype):
    """Scatter every GRU direction's PyTorch-layout params into the combined
    [R | Z | NI | NH] gate layout (each group 4H wide, direction d at lanes
    d*H:(d+1)*H), and build the block-diagonal recurrent weight."""
    H = params["proj_b"].shape[0]
    HC, GC = 4 * H, 16 * H

    def pack_dir(d, w_ih, w_hh, b_ih, b_hh):
        Wi = w_ih.reshape(3, H, H)      # [W_ir, W_iz, W_in]
        Wh = w_hh.reshape(3, H, H)      # [W_hr, W_hz, W_hn]
        bi = b_ih.reshape(3, H)
        bh = b_hh.reshape(3, H)
        c = d * H                       # this direction's lane offset per group
        wx = jnp.zeros((H, GC), jnp.float32)
        bx = jnp.zeros((1, GC), jnp.float32)
        wh = jnp.zeros((H, GC), jnp.float32)
        wx = wx.at[:, 0 * HC + c:0 * HC + c + H].set(Wi[0].T)             # R
        wx = wx.at[:, 1 * HC + c:1 * HC + c + H].set(Wi[1].T)             # Z
        wx = wx.at[:, 2 * HC + c:2 * HC + c + H].set(Wi[2].T)             # NI
        wh = wh.at[:, 0 * HC + c:0 * HC + c + H].set(Wh[0].T)             # R
        wh = wh.at[:, 1 * HC + c:1 * HC + c + H].set(Wh[1].T)             # Z
        wh = wh.at[:, 3 * HC + c:3 * HC + c + H].set(Wh[2].T)             # NH
        bx = bx.at[:, 0 * HC + c:0 * HC + c + H].set((bi[0] + bh[0])[None])
        bx = bx.at[:, 1 * HC + c:1 * HC + c + H].set((bi[1] + bh[1])[None])
        bx = bx.at[:, 2 * HC + c:2 * HC + c + H].set(bi[2][None])
        bx = bx.at[:, 3 * HC + c:3 * HC + c + H].set(bh[2][None])   # b_hn inside r*(.)
        return wx, bx, wh

    a, f = params["atom"], params["frag"]
    packs = [
        pack_dir(0, a["w_ih_f"], a["w_hh_f"], a["b_ih_f"], a["b_hh_f"]),  # atom fwd
        pack_dir(1, a["w_ih_r"], a["w_hh_r"], a["b_ih_r"], a["b_hh_r"]),  # atom bwd
        pack_dir(2, f["w_ih_f"], f["w_hh_f"], f["b_ih_f"], f["b_hh_f"]),  # frag fwd
        pack_dir(3, f["w_ih_r"], f["w_hh_r"], f["b_ih_r"], f["b_hh_r"]),  # frag bwd
    ]
    wx_all = jnp.stack([p[0] for p in packs]).astype(compute_dtype)          # (4, H, 16H)
    bx_all = jnp.stack([p[1] for p in packs])                                # (4, 1, 16H) f32
    wh_all = jnp.concatenate([p[2] for p in packs], axis=0).astype(compute_dtype)  # (4H, 16H)
    wp = jnp.transpose(params["proj_w"]).astype(compute_dtype)               # (4H, H)
    bp = params["proj_b"].reshape(1, -1).astype(jnp.float32)                 # (1, H)
    return wx_all, bx_all, wh_all, wp, bp


def node_gru_forward(params, atom_rep, frag_rep, compute_dtype=jnp.bfloat16):
    """Pallas implementation of Node_GRU.forward (bidirectional=True).

    compute_dtype: dtype of the MXU operands (weights / x / h / embed).  bf16 is
    the single-pass MXU fast path on v5e/v6e/v7x; accumulation and all
    nonlinearities stay in f32 either way (compute_dtype=f32 == exact path).
    """
    B, T_a, H = atom_rep.shape
    T_f = frag_rep.shape[1]
    wx_all, bx_all, wh_all, wp, bp = _pack_params(params, compute_dtype)

    # Time-major, time-flattened activations so every unrolled step reads a
    # contiguous row block (pure sublane slice, no lane relayout).
    atom_tb = jnp.transpose(atom_rep, (1, 0, 2)).reshape(T_a * B, H)
    frag_tb = jnp.transpose(frag_rep, (1, 0, 2)).reshape(T_f * B, H)

    HC, GC = 4 * H, 16 * H
    T_max = max(T_a, T_f)

    def nbytes(x):
        return int(x.size) * x.dtype.itemsize

    cost = pl.CostEstimate(
        flops=int(2 * ((T_a + T_f + 2) * B * H * GC      # hoisted input matmuls
                       + T_max * B * HC * GC             # fused recurrence
                       + B * HC * H)),                   # projection
        transcendentals=int(3 * T_max * B * HC),
        bytes_accessed=int(sum(nbytes(x) for x in
                               (atom_tb, frag_tb, wx_all, bx_all, wh_all, wp, bp))
                           + B * H * 4),
    )

    kernel = functools.partial(_node_gru_kernel, B=B, T_atom=T_a, T_frag=T_f)
    vmem = pl.BlockSpec(memory_space=pltpu.MemorySpace.VMEM)

    # Single fused launch, no grid: total resident footprint is < 400 KB, far
    # below VMEM on v5e/v6e/v7x, so tiling/pipelining would only add overhead.
    # TODO(synk): for many-molecule throughput, add a leading "parallel" grid
    # axis (constant index_maps for the weights) so v7x's 2nd TC shares work.
    return pl.pallas_call(
        kernel,
        out_shape=jax.ShapeDtypeStruct((B, H), jnp.float32),
        in_specs=[vmem] * 7,
        out_specs=vmem,
        cost_estimate=cost,
    )(atom_tb, frag_tb, wx_all, bx_all, wh_all, wp, bp)


# --------------------------- pure-JAX reference ----------------------------- #

def _gru_dir_ref(x, w_ih, w_hh, b_ih, b_hh, reverse):
    B, T, H = x.shape
    xs = jnp.transpose(x, (1, 0, 2))
    if reverse:
        xs = xs[::-1]

    def step(h, x_t):
        gi = x_t @ w_ih.T + b_ih
        gh = h @ w_hh.T + b_hh
        i_r, i_z, i_n = jnp.split(gi, 3, axis=-1)
        h_r, h_z, h_n = jnp.split(gh, 3, axis=-1)
        r = jax.nn.sigmoid(i_r + h_r)
        z = jax.nn.sigmoid(i_z + h_z)
        n = jnp.tanh(i_n + r * h_n)
        h_new = (1.0 - z) * n + z * h
        return h_new, h_new

    h0 = jnp.zeros((B, H), jnp.float32)
    _, ys = lax.scan(step, h0, xs)
    if reverse:
        ys = ys[::-1]
    return jnp.transpose(ys, (1, 0, 2))


def node_gru_ref(params, atom_rep, frag_rep):
    a, f = params["atom"], params["frag"]
    ao = jnp.concatenate(
        [_gru_dir_ref(atom_rep, a["w_ih_f"], a["w_hh_f"], a["b_ih_f"], a["b_hh_f"], False),
         _gru_dir_ref(atom_rep, a["w_ih_r"], a["w_hh_r"], a["b_ih_r"], a["b_hh_r"], True)], axis=-1)
    fo = jnp.concatenate(
        [_gru_dir_ref(frag_rep, f["w_ih_f"], f["w_hh_f"], f["b_ih_f"], f["b_hh_f"], False),
         _gru_dir_ref(frag_rep, f["w_ih_r"], f["w_hh_r"], f["b_ih_r"], f["b_hh_r"], True)], axis=-1)
    embed = jnp.concatenate([ao[:, -1, :], fo[:, -1, :]], axis=1)
    return embed @ params["proj_w"].T + params["proj_b"]


# ------------------------------- params ------------------------------------ #

def init_params(key, H):
    scale = 1.0 / np.sqrt(H)

    def u(k, shape):
        return jax.random.uniform(k, shape, jnp.float32, -scale, scale)

    keys = iter(jax.random.split(key, 32))

    def gru_dir():
        return {
            "w_ih": u(next(keys), (3 * H, H)),
            "w_hh": u(next(keys), (3 * H, H)),
            "b_ih": u(next(keys), (3 * H,)),
            "b_hh": u(next(keys), (3 * H,)),
        }

    def gru_bidir():
        fwd, rev = gru_dir(), gru_dir()
        return {
            "w_ih_f": fwd["w_ih"], "w_hh_f": fwd["w_hh"], "b_ih_f": fwd["b_ih"], "b_hh_f": fwd["b_hh"],
            "w_ih_r": rev["w_ih"], "w_hh_r": rev["w_hh"], "b_ih_r": rev["b_ih"], "b_hh_r": rev["b_hh"],
        }

    return {
        "atom": gru_bidir(),
        "frag": gru_bidir(),
        "proj_w": u(next(keys), (H, 4 * H)),   # Linear(hid_dim*2*2 -> hid_dim)
        "proj_b": u(next(keys), (H,)),
    }


# --------------------------------- main ------------------------------------- #

if __name__ == "__main__":
    H = 32          # hid_dim (small, consistent with the module)
    B = 2           # batch
    T_ATOM = 8      # atom sequence length
    T_FRAG = 6      # fragment sequence length

    key = jax.random.PRNGKey(0)
    k_p, k_a, k_f = jax.random.split(key, 3)
    params = init_params(k_p, H)
    atom_rep = jax.random.normal(k_a, (B, T_ATOM, H), jnp.float32)
    frag_rep = jax.random.normal(k_f, (B, T_FRAG, H), jnp.float32)

    ref = jax.block_until_ready(node_gru_ref(params, atom_rep, frag_rep))

    # Exact path (f32 MXU operands): must reproduce nn.GRU semantics tightly.
    out_f32 = jax.block_until_ready(
        node_gru_forward(params, atom_rep, frag_rep, compute_dtype=jnp.float32))
    np.testing.assert_allclose(np.asarray(out_f32), np.asarray(ref),
                               rtol=2e-3, atol=2e-3)

    # Fast path (bf16 MXU operands; f32 accumulation + f32 nonlinearities).
    out_bf16 = jax.block_until_ready(
        node_gru_forward(params, atom_rep, frag_rep, compute_dtype=jnp.bfloat16))
    np.testing.assert_allclose(np.asarray(out_bf16), np.asarray(ref),
                               rtol=3e-2, atol=3e-2)

    print("KERNEL_OK")
</pallas_src>

<mosaic_0001>
module attributes {stable_mosaic.version = 11 : i64} {
  func.func @_node_gru_kernel(%arg0: memref<16x32xf32, #tpu.memory_space<vmem>>, %arg1: memref<12x32xf32, #tpu.memory_space<vmem>>, %arg2: memref<4x32x512xf32, #tpu.memory_space<vmem>>, %arg3: memref<4x1x512xf32, #tpu.memory_space<vmem>>, %arg4: memref<128x512xf32, #tpu.memory_space<vmem>>, %arg5: memref<128x32xf32, #tpu.memory_space<vmem>>, %arg6: memref<1x32xf32, #tpu.memory_space<vmem>>, %arg7: memref<2x32xf32, #tpu.memory_space<vmem>>) attributes {dimension_semantics = [], scalar_prefetch = 0 : i64, scratch_operands = 0 : i64, tpu.core_type = #tpu.core_type<tc>} {
    %c0 = arith.constant 0 : index
    %c0_0 = arith.constant 0 : index
    %0 = vector.load %arg0[%c0, %c0_0] : memref<16x32xf32, #tpu.memory_space<vmem>>, vector<16x32xf32>
    %c0_1 = arith.constant 0 : index
    %c0_2 = arith.constant 0 : index
    %1 = vector.load %arg1[%c0_1, %c0_2] : memref<12x32xf32, #tpu.memory_space<vmem>>, vector<12x32xf32>
    %c0_3 = arith.constant 0 : index
    %c0_4 = arith.constant 0 : index
    %c0_5 = arith.constant 0 : index
    %2 = vector.load %arg2[%c0_3, %c0_4, %c0_5] : memref<4x32x512xf32, #tpu.memory_space<vmem>>, vector<1x32x512xf32>
    %3 = vector.shape_cast %2 : vector<1x32x512xf32> to vector<32x512xf32>
    %cst = arith.constant dense<0.000000e+00> : vector<16x512xf32>
    %4 = tpu.matmul %0, %3, %cst {dimension_numbers = #tpu.dot_dimension_numbers<[1], [0], [0], [1], [0, 0, 1, 1], [], []>} : vector<16x32xf32>, vector<32x512xf32>, vector<16x512xf32> -> vector<16x512xf32>
    %c0_6 = arith.constant 0 : index
    %c0_7 = arith.constant 0 : index
    %c0_8 = arith.constant 0 : index
    %5 = vector.load %arg3[%c0_6, %c0_7, %c0_8] : memref<4x1x512xf32, #tpu.memory_space<vmem>>, vector<1x1x512xf32>
    %6 = vector.shape_cast %5 : vector<1x1x512xf32> to vector<1x512xf32>
    %7 = vector.broadcast %6 : vector<1x512xf32> to vector<16x512xf32>
    %8 = arith.addf %4, %7 : vector<16x512xf32>
    %c2 = arith.constant 2 : index
    %c0_9 = arith.constant 0 : index
    %c0_10 = arith.constant 0 : index
    %9 = vector.load %arg2[%c2, %c0_9, %c0_10] : memref<4x32x512xf32, #tpu.memory_space<vmem>>, vector<1x32x512xf32>
    %10 = vector.shape_cast %9 : vector<1x32x512xf32> to vector<32x512xf32>
    %cst_11 = arith.constant dense<0.000000e+00> : vector<12x512xf32>
    %11 = tpu.matmul %1, %10, %cst_11 {dimension_numbers = #tpu.dot_dimension_numbers<[1], [0], [0], [1], [0, 0, 1, 1], [], []>} : vector<12x32xf32>, vector<32x512xf32>, vector<12x512xf32> -> vector<12x512xf32>
    %c2_12 = arith.constant 2 : index
    %c0_13 = arith.constant 0 : index
    %c0_14 = arith.constant 0 : index
    %12 = vector.load %arg3[%c2_12, %c0_13, %c0_14] : memref<4x1x512xf32, #tpu.memory_space<vmem>>, vector<1x1x512xf32>
    %13 = vector.shape_cast %12 : vector<1x1x512xf32> to vector<1x512xf32>
    %14 = vector.broadcast %13 : vector<1x512xf32> to vector<12x512xf32>
    %15 = arith.addf %11, %14 : vector<12x512xf32>
    %16 = vector.extract_strided_slice %0 {offsets = [14, 0], sizes = [2, 32], strides = [1, 1]} : vector<16x32xf32> to vector<2x32xf32>
    %c1 = arith.constant 1 : index
    %c0_15 = arith.constant 0 : index
    %c0_16 = arith.constant 0 : index
    %17 = vector.load %arg2[%c1, %c0_15, %c0_16] : memref<4x32x512xf32, #tpu.memory_space<vmem>>, vector<1x32x512xf32>
    %18 = vector.shape_cast %17 : vector<1x32x512xf32> to vector<32x512xf32>
    %cst_17 = arith.constant dense<0.000000e+00> : vector<2x512xf32>
    %19 = tpu.matmul %16, %18, %cst_17 {dimension_numbers = #tpu.dot_dimension_numbers<[1], [0], [0], [1], [0, 0, 1, 1], [], []>} : vector<2x32xf32>, vector<32x512xf32>, vector<2x512xf32> -> vector<2x512xf32>
    %c1_18 = arith.constant 1 : index
    %c0_19 = arith.constant 0 : index
    %c0_20 = arith.constant 0 : index
    %20 = vector.load %arg3[%c1_18, %c0_19, %c0_20] : memref<4x1x512xf32, #tpu.memory_space<vmem>>, vector<1x1x512xf32>
    %21 = vector.shape_cast %20 : vector<1x1x512xf32> to vector<1x512xf32>
    %22 = vector.broadcast %21 : vector<1x512xf32> to vector<2x512xf32>
    %23 = arith.addf %19, %22 : vector<2x512xf32>
    %24 = vector.extract_strided_slice %1 {offsets = [10, 0], sizes = [2, 32], strides = [1, 1]} : vector<12x32xf32> to vector<2x32xf32>
    %c3 = arith.constant 3 : index
    %c0_21 = arith.constant 0 : index
    %c0_22 = arith.constant 0 : index
    %25 = vector.load %arg2[%c3, %c0_21, %c0_22] : memref<4x32x512xf32, #tpu.memory_space<vmem>>, vector<1x32x512xf32>
    %26 = vector.shape_cast %25 : vector<1x32x512xf32> to vector<32x512xf32>
    %cst_23 = arith.constant dense<0.000000e+00> : vector<2x512xf32>
    %27 = tpu.matmul %24, %26, %cst_23 {dimension_numbers = #tpu.dot_dimension_numbers<[1], [0], [0], [1], [0, 0, 1, 1], [], []>} : vector<2x32xf32>, vector<32x512xf32>, vector<2x512xf32> -> vector<2x512xf32>
    %c3_24 = arith.constant 3 : index
    %c0_25 = arith.constant 0 : index
    %c0_26 = arith.constant 0 : index
    %28 = vector.load %arg3[%c3_24, %c0_25, %c0_26] : memref<4x1x512xf32, #tpu.memory_space<vmem>>, vector<1x1x512xf32>
    %29 = vector.shape_cast %28 : vector<1x1x512xf32> to vector<1x512xf32>
    %30 = vector.broadcast %29 : vector<1x512xf32> to vector<2x512xf32>
    %31 = arith.addf %27, %30 : vector<2x512xf32>
    %32 = vector.extract_strided_slice %8 {offsets = [0, 0], sizes = [2, 512], strides = [1, 1]} : vector<16x512xf32> to vector<2x512xf32>
    %33 = vector.extract_strided_slice %8 {offsets = [2, 0], sizes = [2, 512], strides = [1, 1]} : vector<16x512xf32> to vector<2x512xf32>
    %34 = vector.extract_strided_slice %8 {offsets = [4, 0], sizes = [2, 512], strides = [1, 1]} : vector<16x512xf32> to vector<2x512xf32>
    %35 = vector.extract_strided_slice %15 {offsets = [0, 0], sizes = [2, 512], strides = [1, 1]} : vector<12x512xf32> to vector<2x512xf32>
    %36 = arith.addf %34, %35 : vector<2x512xf32>
    %37 = vector.extract_strided_slice %8 {offsets = [6, 0], sizes = [2, 512], strides = [1, 1]} : vector<16x512xf32> to vector<2x512xf32>
    %38 = vector.extract_strided_slice %15 {offsets = [2, 0], sizes = [2, 512], strides = [1, 1]} : vector<12x512xf32> to vector<2x512xf32>
    %39 = arith.addf %37, %38 : vector<2x512xf32>
    %40 = vector.extract_strided_slice %8 {offsets = [8, 0], sizes = [2, 512], strides = [1, 1]} : vector<16x512xf32> to vector<2x512xf32>
    %41 = vector.extract_strided_slice %15 {offsets = [4, 0], sizes = [2, 512], strides = [1, 1]} : vector<12x512xf32> to vector<2x512xf32>
    %42 = arith.addf %40, %41 : vector<2x512xf32>
    %43 = vector.extract_strided_slice %8 {offsets = [10, 0], sizes = [2, 512], strides = [1, 1]} : vector<16x512xf32> to vector<2x512xf32>
    %44 = vector.extract_strided_slice %15 {offsets = [6, 0], sizes = [2, 512], strides = [1, 1]} : vector<12x512xf32> to vector<2x512xf32>
    %45 = arith.addf %43, %44 : vector<2x512xf32>
    %46 = vector.extract_strided_slice %8 {offsets = [12, 0], sizes = [2, 512], strides = [1, 1]} : vector<16x512xf32> to vector<2x512xf32>
    %47 = vector.extract_strided_slice %15 {offsets = [8, 0], sizes = [2, 512], strides = [1, 1]} : vector<12x512xf32> to vector<2x512xf32>
    %48 = arith.addf %46, %47 : vector<2x512xf32>
    %49 = vector.extract_strided_slice %8 {offsets = [14, 0], sizes = [2, 512], strides = [1, 1]} : vector<16x512xf32> to vector<2x512xf32>
    %50 = vector.extract_strided_slice %15 {offsets = [10, 0], sizes = [2, 512], strides = [1, 1]} : vector<12x512xf32> to vector<2x512xf32>
    %51 = arith.addf %49, %50 : vector<2x512xf32>
    %52 = arith.addf %51, %23 : vector<2x512xf32>
    %53 = arith.addf %52, %31 : vector<2x512xf32>
    %c0_27 = arith.constant 0 : index
    %c0_28 = arith.constant 0 : index
    %54 = vector.load %arg4[%c0_27, %c0_28] : memref<128x512xf32, #tpu.memory_space<vmem>>, vector<128x512xf32>
    %cst_29 = arith.constant 0.000000e+00 : f32
    %55 = vector.broadcast %cst_29 : f32 to vector<2x128xf32>
    %cst_30 = arith.constant dense<0.000000e+00> : vector<2x512xf32>
    %56 = tpu.matmul %55, %54, %cst_30 {dimension_numbers = #tpu.dot_dimension_numbers<[1], [0], [0], [1], [0, 0, 1, 1], [], []>} : vector<2x128xf32>, vector<128x512xf32>, vector<2x512xf32> -> vector<2x512xf32>
    %57 = arith.addf %32, %56 : vector<2x512xf32>
    %58 = vector.extract_strided_slice %57 {offsets = [0, 0], sizes = [2, 128], strides = [1, 1]} : vector<2x512xf32> to vector<2x128xf32>
    %59 = arith.negf %58 : vector<2x128xf32>
    %60 = math.exp %59 : vector<2x128xf32>
    %cst_31 = arith.constant 1.000000e+00 : f32
    %61 = vector.broadcast %cst_31 : f32 to vector<2x128xf32>
    %62 = arith.addf %61, %60 : vector<2x128xf32>
    %63 = arith.divf %61, %62 : vector<2x128xf32>
    %64 = vector.extract_strided_slice %57 {offsets = [0, 128], sizes = [2, 128], strides = [1, 1]} : vector<2x512xf32> to vector<2x128xf32>
    %65 = arith.negf %64 : vector<2x128xf32>
    %66 = math.exp %65 : vector<2x128xf32>
    %cst_32 = arith.constant 1.000000e+00 : f32
    %67 = vector.broadcast %cst_32 : f32 to vector<2x128xf32>
    %68 = arith.addf %67, %66 : vector<2x128xf32>
    %69 = arith.divf %67, %68 : vector<2x128xf32>
    %70 = vector.extract_strided_slice %57 {offsets = [0, 256], sizes = [2, 128], strides = [1, 1]} : vector<2x512xf32> to vector<2x128xf32>
    %71 = vector.extract_strided_slice %57 {offsets = [0, 384], sizes = [2, 128], strides = [1, 1]} : vector<2x512xf32> to vector<2x128xf32>
    %72 = arith.mulf %63, %71 : vector<2x128xf32>
    %73 = arith.addf %70, %72 : vector<2x128xf32>
    %74 = math.tanh %73 : vector<2x128xf32>
    %cst_33 = arith.constant 1.000000e+00 : f32
    %75 = vector.broadcast %cst_33 : f32 to vector<2x128xf32>
    %76 = arith.subf %75, %69 : vector<2x128xf32>
    %77 = arith.mulf %76, %74 : vector<2x128xf32>
    %78 = arith.mulf %69, %55 : vector<2x128xf32>
    %79 = arith.addf %77, %78 : vector<2x128xf32>
    %cst_34 = arith.constant dense<0.000000e+00> : vector<2x512xf32>
    %80 = tpu.matmul %79, %54, %cst_34 {dimension_numbers = #tpu.dot_dimension_numbers<[1], [0], [0], [1], [0, 0, 1, 1], [], []>} : vector<2x128xf32>, vector<128x512xf32>, vector<2x512xf32> -> vector<2x512xf32>
    %81 = arith.addf %33, %80 : vector<2x512xf32>
    %82 = vector.extract_strided_slice %81 {offsets = [0, 0], sizes = [2, 128], strides = [1, 1]} : vector<2x512xf32> to vector<2x128xf32>
    %83 = arith.negf %82 : vector<2x128xf32>
    %84 = math.exp %83 : vector<2x128xf32>
    %cst_35 = arith.constant 1.000000e+00 : f32
    %85 = vector.broadcast %cst_35 : f32 to vector<2x128xf32>
    %86 = arith.addf %85, %84 : vector<2x128xf32>
    %87 = arith.divf %85, %86 : vector<2x128xf32>
    %88 = vector.extract_strided_slice %81 {offsets = [0, 128], sizes = [2, 128], strides = [1, 1]} : vector<2x512xf32> to vector<2x128xf32>
    %89 = arith.negf %88 : vector<2x128xf32>
    %90 = math.exp %89 : vector<2x128xf32>
    %cst_36 = arith.constant 1.000000e+00 : f32
    %91 = vector.broadcast %cst_36 : f32 to vector<2x128xf32>
    %92 = arith.addf %91, %90 : vector<2x128xf32>
    %93 = arith.divf %91, %92 : vector<2x128xf32>
    %94 = vector.extract_strided_slice %81 {offsets = [0, 256], sizes = [2, 128], strides = [1, 1]} : vector<2x512xf32> to vector<2x128xf32>
    %95 = vector.extract_strided_slice %81 {offsets = [0, 384], sizes = [2, 128], strides = [1, 1]} : vector<2x512xf32> to vector<2x128xf32>
    %96 = arith.mulf %87, %95 : vector<2x128xf32>
    %97 = arith.addf %94, %96 : vector<2x128xf32>
    %98 = math.tanh %97 : vector<2x128xf32>
    %cst_37 = arith.constant 1.000000e+00 : f32
    %99 = vector.broadcast %cst_37 : f32 to vector<2x128xf32>
    %100 = arith.subf %99, %93 : vector<2x128xf32>
    %101 = arith.mulf %100, %98 : vector<2x128xf32>
    %102 = arith.mulf %93, %79 : vector<2x128xf32>
    %103 = arith.addf %101, %102 : vector<2x128xf32>
    %cst_38 = arith.constant dense<0.000000e+00> : vector<2x512xf32>
    %104 = tpu.matmul %103, %54, %cst_38 {dimension_numbers = #tpu.dot_dimension_numbers<[1], [0], [0], [1], [0, 0, 1, 1], [], []>} : vector<2x128xf32>, vector<128x512xf32>, vector<2x512xf32> -> vector<2x512xf32>
    %105 = arith.addf %36, %104 : vector<2x512xf32>
    %106 = vector.extract_strided_slice %105 {offsets = [0, 0], sizes = [2, 128], strides = [1, 1]} : vector<2x512xf32> to vector<2x128xf32>
    %107 = arith.negf %106 : vector<2x128xf32>
    %108 = math.exp %107 : vector<2x128xf32>
    %cst_39 = arith.constant 1.000000e+00 : f32
    %109 = vector.broadcast %cst_39 : f32 to vector<2x128xf32>
    %110 = arith.addf %109, %108 : vector<2x128xf32>
    %111 = arith.divf %109, %110 : vector<2x128xf32>
    %112 = vector.extract_strided_slice %105 {offsets = [0, 128], sizes = [2, 128], strides = [1, 1]} : vector<2x512xf32> to vector<2x128xf32>
    %113 = arith.negf %112 : vector<2x128xf32>
    %114 = math.exp %113 : vector<2x128xf32>
    %cst_40 = arith.constant 1.000000e+00 : f32
    %115 = vector.broadcast %cst_40 : f32 to vector<2x128xf32>
    %116 = arith.addf %115, %114 : vector<2x128xf32>
    %117 = arith.divf %115, %116 : vector<2x128xf32>
    %118 = vector.extract_strided_slice %105 {offsets = [0, 256], sizes = [2, 128], strides = [1, 1]} : vector<2x512xf32> to vector<2x128xf32>
    %119 = vector.extract_strided_slice %105 {offsets = [0, 384], sizes = [2, 128], strides = [1, 1]} : vector<2x512xf32> to vector<2x128xf32>
    %120 = arith.mulf %111, %119 : vector<2x128xf32>
    %121 = arith.addf %118, %120 : vector<2x128xf32>
    %122 = math.tanh %121 : vector<2x128xf32>
    %cst_41 = arith.constant 1.000000e+00 : f32
    %123 = vector.broadcast %cst_41 : f32 to vector<2x128xf32>
    %124 = arith.subf %123, %117 : vector<2x128xf32>
    %125 = arith.mulf %124, %122 : vector<2x128xf32>
    %126 = arith.mulf %117, %103 : vector<2x128xf32>
    %127 = arith.addf %125, %126 : vector<2x128xf32>
    %cst_42 = arith.constant dense<0.000000e+00> : vector<2x512xf32>
    %128 = tpu.matmul %127, %54, %cst_42 {dimension_numbers = #tpu.dot_dimension_numbers<[1], [0], [0], [1], [0, 0, 1, 1], [], []>} : vector<2x128xf32>, vector<128x512xf32>, vector<2x512xf32> -> vector<2x512xf32>
    %129 = arith.addf %39, %128 : vector<2x512xf32>
    %130 = vector.extract_strided_slice %129 {offsets = [0, 0], sizes = [2, 128], strides = [1, 1]} : vector<2x512xf32> to vector<2x128xf32>
    %131 = arith.negf %130 : vector<2x128xf32>
    %132 = math.exp %131 : vector<2x128xf32>
    %cst_43 = arith.constant 1.000000e+00 : f32
    %133 = vector.broadcast %cst_43 : f32 to vector<2x128xf32>
    %134 = arith.addf %133, %132 : vector<2x128xf32>
    %135 = arith.divf %133, %134 : vector<2x128xf32>
    %136 = vector.extract_strided_slice %129 {offsets = [0, 128], sizes = [2, 128], strides = [1, 1]} : vector<2x512xf32> to vector<2x128xf32>
    %137 = arith.negf %136 : vector<2x128xf32>
    %138 = math.exp %137 : vector<2x128xf32>
    %cst_44 = arith.constant 1.000000e+00 : f32
    %139 = vector.broadcast %cst_44 : f32 to vector<2x128xf32>
    %140 = arith.addf %139, %138 : vector<2x128xf32>
    %141 = arith.divf %139, %140 : vector<2x128xf32>
    %142 = vector.extract_strided_slice %129 {offsets = [0, 256], sizes = [2, 128], strides = [1, 1]} : vector<2x512xf32> to vector<2x128xf32>
    %143 = vector.extract_strided_slice %129 {offsets = [0, 384], sizes = [2, 128], strides = [1, 1]} : vector<2x512xf32> to vector<2x128xf32>
    %144 = arith.mulf %135, %143 : vector<2x128xf32>
    %145 = arith.addf %142, %144 : vector<2x128xf32>
    %146 = math.tanh %145 : vector<2x128xf32>
    %cst_45 = arith.constant 1.000000e+00 : f32
    %147 = vector.broadcast %cst_45 : f32 to vector<2x128xf32>
    %148 = arith.subf %147, %141 : vector<2x128xf32>
    %149 = arith.mulf %148, %146 : vector<2x128xf32>
    %150 = arith.mulf %141, %127 : vector<2x128xf32>
    %151 = arith.addf %149, %150 : vector<2x128xf32>
    %cst_46 = arith.constant dense<0.000000e+00> : vector<2x512xf32>
    %152 = tpu.matmul %151, %54, %cst_46 {dimension_numbers = #tpu.dot_dimension_numbers<[1], [0], [0], [1], [0, 0, 1, 1], [], []>} : vector<2x128xf32>, vector<128x512xf32>, vector<2x512xf32> -> vector<2x512xf32>
    %153 = arith.addf %42, %152 : vector<2x512xf32>
    %154 = vector.extract_strided_slice %153 {offsets = [0, 0], sizes = [2, 128], strides = [1, 1]} : vector<2x512xf32> to vector<2x128xf32>
    %155 = arith.negf %154 : vector<2x128xf32>
    %156 = math.exp %155 : vector<2x128xf32>
    %cst_47 = arith.constant 1.000000e+00 : f32
    %157 = vector.broadcast %cst_47 : f32 to vector<2x128xf32>
    %158 = arith.addf %157, %156 : vector<2x128xf32>
    %159 = arith.divf %157, %158 : vector<2x128xf32>
    %160 = vector.extract_strided_slice %153 {offsets = [0, 128], sizes = [2, 128], strides = [1, 1]} : vector<2x512xf32> to vector<2x128xf32>
    %161 = arith.negf %160 : vector<2x128xf32>
    %162 = math.exp %161 : vector<2x128xf32>
    %cst_48 = arith.constant 1.000000e+00 : f32
    %163 = vector.broadcast %cst_48 : f32 to vector<2x128xf32>
    %164 = arith.addf %163, %162 : vector<2x128xf32>
    %165 = arith.divf %163, %164 : vector<2x128xf32>
    %166 = vector.extract_strided_slice %153 {offsets = [0, 256], sizes = [2, 128], strides = [1, 1]} : vector<2x512xf32> to vector<2x128xf32>
    %167 = vector.extract_strided_slice %153 {offsets = [0, 384], sizes = [2, 128], strides = [1, 1]} : vector<2x512xf32> to vector<2x128xf32>
    %168 = arith.mulf %159, %167 : vector<2x128xf32>
    %169 = arith.addf %166, %168 : vector<2x128xf32>
    %170 = math.tanh %169 : vector<2x128xf32>
    %cst_49 = arith.constant 1.000000e+00 : f32
    %171 = vector.broadcast %cst_49 : f32 to vector<2x128xf32>
    %172 = arith.subf %171, %165 : vector<2x128xf32>
    %173 = arith.mulf %172, %170 : vector<2x128xf32>
    %174 = arith.mulf %165, %151 : vector<2x128xf32>
    %175 = arith.addf %173, %174 : vector<2x128xf32>
    %cst_50 = arith.constant dense<0.000000e+00> : vector<2x512xf32>
    %176 = tpu.matmul %175, %54, %cst_50 {dimension_numbers = #tpu.dot_dimension_numbers<[1], [0], [0], [1], [0, 0, 1, 1], [], []>} : vector<2x128xf32>, vector<128x512xf32>, vector<2x512xf32> -> vector<2x512xf32>
    %177 = arith.addf %45, %176 : vector<2x512xf32>
    %178 = vector.extract_strided_slice %177 {offsets = [0, 0], sizes = [2, 128], strides = [1, 1]} : vector<2x512xf32> to vector<2x128xf32>
    %179 = arith.negf %178 : vector<2x128xf32>
    %180 = math.exp %179 : vector<2x128xf32>
    %cst_51 = arith.constant 1.000000e+00 : f32
    %181 = vector.broadcast %cst_51 : f32 to vector<2x128xf32>
    %182 = arith.addf %181, %180 : vector<2x128xf32>
    %183 = arith.divf %181, %182 : vector<2x128xf32>
    %184 = vector.extract_strided_slice %177 {offsets = [0, 128], sizes = [2, 128], strides = [1, 1]} : vector<2x512xf32> to vector<2x128xf32>
    %185 = arith.negf %184 : vector<2x128xf32>
    %186 = math.exp %185 : vector<2x128xf32>
    %cst_52 = arith.constant 1.000000e+00 : f32
    %187 = vector.broadcast %cst_52 : f32 to vector<2x128xf32>
    %188 = arith.addf %187, %186 : vector<2x128xf32>
    %189 = arith.divf %187, %188 : vector<2x128xf32>
    %190 = vector.extract_strided_slice %177 {offsets = [0, 256], sizes = [2, 128], strides = [1, 1]} : vector<2x512xf32> to vector<2x128xf32>
    %191 = vector.extract_strided_slice %177 {offsets = [0, 384], sizes = [2, 128], strides = [1, 1]} : vector<2x512xf32> to vector<2x128xf32>
    %192 = arith.mulf %183, %191 : vector<2x128xf32>
    %193 = arith.addf %190, %192 : vector<2x128xf32>
    %194 = math.tanh %193 : vector<2x128xf32>
    %cst_53 = arith.constant 1.000000e+00 : f32
    %195 = vector.broadcast %cst_53 : f32 to vector<2x128xf32>
    %196 = arith.subf %195, %189 : vector<2x128xf32>
    %197 = arith.mulf %196, %194 : vector<2x128xf32>
    %198 = arith.mulf %189, %175 : vector<2x128xf32>
    %199 = arith.addf %197, %198 : vector<2x128xf32>
    %cst_54 = arith.constant dense<0.000000e+00> : vector<2x512xf32>
    %200 = tpu.matmul %199, %54, %cst_54 {dimension_numbers = #tpu.dot_dimension_numbers<[1], [0], [0], [1], [0, 0, 1, 1], [], []>} : vector<2x128xf32>, vector<128x512xf32>, vector<2x512xf32> -> vector<2x512xf32>
    %201 = arith.addf %48, %200 : vector<2x512xf32>
    %202 = vector.extract_strided_slice %201 {offsets = [0, 0], sizes = [2, 128], strides = [1, 1]} : vector<2x512xf32> to vector<2x128xf32>
    %203 = arith.negf %202 : vector<2x128xf32>
    %204 = math.exp %203 : vector<2x128xf32>
    %cst_55 = arith.constant 1.000000e+00 : f32
    %205 = vector.broadcast %cst_55 : f32 to vector<2x128xf32>
    %206 = arith.addf %205, %204 : vector<2x128xf32>
    %207 = arith.divf %205, %206 : vector<2x128xf32>
    %208 = vector.extract_strided_slice %201 {offsets = [0, 128], sizes = [2, 128], strides = [1, 1]} : vector<2x512xf32> to vector<2x128xf32>
    %209 = arith.negf %208 : vector<2x128xf32>
    %210 = math.exp %209 : vector<2x128xf32>
    %cst_56 = arith.constant 1.000000e+00 : f32
    %211 = vector.broadcast %cst_56 : f32 to vector<2x128xf32>
    %212 = arith.addf %211, %210 : vector<2x128xf32>
    %213 = arith.divf %211, %212 : vector<2x128xf32>
    %214 = vector.extract_strided_slice %201 {offsets = [0, 256], sizes = [2, 128], strides = [1, 1]} : vector<2x512xf32> to vector<2x128xf32>
    %215 = vector.extract_strided_slice %201 {offsets = [0, 384], sizes = [2, 128], strides = [1, 1]} : vector<2x512xf32> to vector<2x128xf32>
    %216 = arith.mulf %207, %215 : vector<2x128xf32>
    %217 = arith.addf %214, %216 : vector<2x128xf32>
    %218 = math.tanh %217 : vector<2x128xf32>
    %cst_57 = arith.constant 1.000000e+00 : f32
    %219 = vector.broadcast %cst_57 : f32 to vector<2x128xf32>
    %220 = arith.subf %219, %213 : vector<2x128xf32>
    %221 = arith.mulf %220, %218 : vector<2x128xf32>
    %222 = arith.mulf %213, %199 : vector<2x128xf32>
    %223 = arith.addf %221, %222 : vector<2x128xf32>
    %cst_58 = arith.constant dense<0.000000e+00> : vector<2x512xf32>
    %224 = tpu.matmul %223, %54, %cst_58 {dimension_numbers = #tpu.dot_dimension_numbers<[1], [0], [0], [1], [0, 0, 1, 1], [], []>} : vector<2x128xf32>, vector<128x512xf32>, vector<2x512xf32> -> vector<2x512xf32>
    %225 = arith.addf %53, %224 : vector<2x512xf32>
    %226 = vector.extract_strided_slice %225 {offsets = [0, 0], sizes = [2, 128], strides = [1, 1]} : vector<2x512xf32> to vector<2x128xf32>
    %227 = arith.negf %226 : vector<2x128xf32>
    %228 = math.exp %227 : vector<2x128xf32>
    %cst_59 = arith.constant 1.000000e+00 : f32
    %229 = vector.broadcast %cst_59 : f32 to vector<2x128xf32>
    %230 = arith.addf %229, %228 : vector<2x128xf32>
    %231 = arith.divf %229, %230 : vector<2x128xf32>
    %232 = vector.extract_strided_slice %225 {offsets = [0, 128], sizes = [2, 128], strides = [1, 1]} : vector<2x512xf32> to vector<2x128xf32>
    %233 = arith.negf %232 : vector<2x128xf32>
    %234 = math.exp %233 : vector<2x128xf32>
    %cst_60 = arith.constant 1.000000e+00 : f32
    %235 = vector.broadcast %cst_60 : f32 to vector<2x128xf32>
    %236 = arith.addf %235, %234 : vector<2x128xf32>
    %237 = arith.divf %235, %236 : vector<2x128xf32>
    %238 = vector.extract_strided_slice %225 {offsets = [0, 256], sizes = [2, 128], strides = [1, 1]} : vector<2x512xf32> to vector<2x128xf32>
    %239 = vector.extract_strided_slice %225 {offsets = [0, 384], sizes = [2, 128], strides = [1, 1]} : vector<2x512xf32> to vector<2x128xf32>
    %240 = arith.mulf %231, %239 : vector<2x128xf32>
    %241 = arith.addf %238, %240 : vector<2x128xf32>
    %242 = math.tanh %241 : vector<2x128xf32>
    %cst_61 = arith.constant 1.000000e+00 : f32
    %243 = vector.broadcast %cst_61 : f32 to vector<2x128xf32>
    %244 = arith.subf %243, %237 : vector<2x128xf32>
    %245 = arith.mulf %244, %242 : vector<2x128xf32>
    %246 = arith.mulf %237, %223 : vector<2x128xf32>
    %247 = arith.addf %245, %246 : vector<2x128xf32>
    %c0_62 = arith.constant 0 : index
    %c0_63 = arith.constant 0 : index
    %248 = vector.load %arg5[%c0_62, %c0_63] : memref<128x32xf32, #tpu.memory_space<vmem>>, vector<128x32xf32>
    %cst_64 = arith.constant dense<0.000000e+00> : vector<2x32xf32>
    %249 = tpu.matmul %247, %248, %cst_64 {dimension_numbers = #tpu.dot_dimension_numbers<[1], [0], [0], [1], [0, 0, 1, 1], [], []>} : vector<2x128xf32>, vector<128x32xf32>, vector<2x32xf32> -> vector<2x32xf32>
    %c0_65 = arith.constant 0 : index
    %c0_66 = arith.constant 0 : index
    %250 = vector.load %arg6[%c0_65, %c0_66] : memref<1x32xf32, #tpu.memory_space<vmem>>, vector<1x32xf32>
    %251 = vector.broadcast %250 : vector<1x32xf32> to vector<2x32xf32>
    %252 = arith.addf %249, %251 : vector<2x32xf32>
    %c0_67 = arith.constant 0 : index
    %c0_68 = arith.constant 0 : index
    %253 = vector.load %arg7[%c0_67, %c0_68] : memref<2x32xf32, #tpu.memory_space<vmem>>, vector<2x32xf32>
    tpu.vector_store %arg7[%c0_67, %c0_68], %252 {strides = array<i32>} : memref<2x32xf32, #tpu.memory_space<vmem>>, vector<2x32xf32>,
    return
  }
}

</mosaic_0001>

<llo_original>
// kernel: tpu_custom_call.1
$region0: #{tpu_custom_call.1}
  #allocation0 [shape = 'u32[]', space=smem, size = 0x4, offset = 0x4, fixed_abs, tag = 'smem constant byte address 0x4 - core index']
  #allocation1 [shape = 'u32[144,128]{1,0:T(1,128)}', space=vmem, size = 0x12000, scoped, tag = 'internal scratch']
  %s0 = inlined_call_operand.vmem [shape: f32[16,32], index: 0, kind: input, shape index: {}]
  %s1 = inlined_call_operand.vmem [shape: f32[12,32], index: 1, kind: input, shape index: {}]
  %s2 = inlined_call_operand.hbm [shape: f32[4,32,512], index: 2, kind: input, shape index: {}]
  %s3 = inlined_call_operand.vmem [shape: f32[4,1,512], index: 3, kind: input, shape index: {}]
  %s4 = inlined_call_operand.hbm [shape: f32[128,512], index: 4, kind: input, shape index: {}]
  %s5 = inlined_call_operand.vmem [shape: f32[128,32], index: 5, kind: input, shape index: {}]
  %s6 = inlined_call_operand.vmem [shape: f32[1,32], index: 6, kind: input, shape index: {}]
  %s7 = inlined_call_operand.hbm [shape: f32[2,32], index: 7, kind: output, shape index: {}]
  %s8 = sld [smem:[#allocation0]]
  $region46: #{tpu_custom_call.1} parent=0
    _
  %s10 = ssub.s32 1, %s8
  %s11 = scalar_select 0, %s10, %s8
  $region1: #{tpu_custom_call.1} parent=0
    #allocation2 [shape = 'u8[262144]{0}', space=vmem, size = 0x40000, scoped, tag = 'input window, operand 2, single buffered']
    #allocation3 [shape = 's32[1]{0}', space=sflag, size = 0x4, scoped, tag = 'scoped memory for tpu_custom_call.1']
    #allocation4 [shape = 's32[1]{0}', space=sflag, size = 0x4, scoped, tag = 'scoped memory for tpu_custom_call.1']
    #allocation5 [shape = 'u8[262144]{0}', space=vmem, size = 0x40000, scoped, tag = 'input window, operand 4, single buffered']
    #allocation6 [shape = 's32[1]{0}', space=sflag, size = 0x4, scoped, tag = 'scoped memory for tpu_custom_call.1']
    #allocation7 [shape = 'u8[1024]{0}', space=vmem, size = 0x400, scoped, tag = 'output window, operand 0, single buffered']
    %12 = vsyncpa [#allocation3], 0
    %13 = vsyncpa [#allocation6], 0
    %14 = vsyncpa [#allocation4], 0
    // Predicated region
    $region2: #{tpu_custom_call.1} parent=1 // pred_check
      _
    $region3: #{tpu_custom_call.1} parent=1 // pred_check_branch
      %16 = sbr.rel (0) target = $region5
    $region4: #{tpu_custom_call.1} parent=1 // pred_region
      _
    $region5: #{tpu_custom_call.1} parent=1 // pred_fallthru
      _
    // Predicated region
    $region6: #{tpu_custom_call.1} parent=1 // pred_check
      _
    $region7: #{tpu_custom_call.1} parent=1 // pred_check_branch
      %18 = sbr.rel (0) target = $region9
    $region8: #{tpu_custom_call.1} parent=1 // pred_region
      _
    $region9: #{tpu_custom_call.1} parent=1 // pred_fallthru
      _
    // Predicated region
    $region10: #{tpu_custom_call.1} parent=1 // pred_check
      _
    $region11: #{tpu_custom_call.1} parent=1 // pred_check_branch
      %20 = sbr.rel (0) target = $region13
    $region12: #{tpu_custom_call.1} parent=1 // pred_region
      %s22 = ssub.s32 8192, 8192
      %23 = vsyncadd [#allocation3], %s22
      %s24 = sshll.u32 [#allocation2], 4
      %s25 = int_to_ptr.vmem [resolvable:$true] %s24
      %30 = dma.hbm_to_vmem [thread:$0]  %s2, 8192, %s25, [#allocation3], 512, 512, 32
    $region13: #{tpu_custom_call.1} parent=1 // pred_fallthru
      _
    // Predicated region
    $region14: #{tpu_custom_call.1} parent=1 // pred_check
      _
    $region15: #{tpu_custom_call.1} parent=1 // pred_check_branch
      %32 = sbr.rel (0) target = $region17
    $region16: #{tpu_custom_call.1} parent=1 // pred_region
      _
    $region17: #{tpu_custom_call.1} parent=1 // pred_fallthru
      _
    // Predicated region
    $region18: #{tpu_custom_call.1} parent=1 // pred_check
      _
    $region19: #{tpu_custom_call.1} parent=1 // pred_check_branch
      %34 = sbr.rel (0) target = $region21
    $region20: #{tpu_custom_call.1} parent=1 // pred_region
      %s36 = ssub.s32 8192, 8192
      %37 = vsyncadd [#allocation6], %s36
      %s38 = sshll.u32 [#allocation5], 4
      %s39 = int_to_ptr.vmem [resolvable:$true] %s38
      %44 = dma.hbm_to_vmem [thread:$0]  %s4, 8192, %s39, [#allocation6], 512, 512, 32
    $region21: #{tpu_custom_call.1} parent=1 // pred_fallthru
      _
    // Predicated region
    $region22: #{tpu_custom_call.1} parent=1 // pred_check
      _
    $region23: #{tpu_custom_call.1} parent=1 // pred_check_branch
      %46 = sbr.rel (0) target = $region25
    $region24: #{tpu_custom_call.1} parent=1 // pred_region
      _
    $region25: #{tpu_custom_call.1} parent=1 // pred_fallthru
      _
    // Predicated region
    $region26: #{tpu_custom_call.1} parent=1 // pred_check
      _
    $region27: #{tpu_custom_call.1} parent=1 // pred_check_branch
      %48 = sbr.rel (0) target = $region29
    $region28: #{tpu_custom_call.1} parent=1 // pred_region
      _
    $region29: #{tpu_custom_call.1} parent=1 // pred_fallthru
      _
    // Predicated region
    $region30: #{tpu_custom_call.1} parent=1 // pred_check
      _
    $region31: #{tpu_custom_call.1} parent=1 // pred_check_branch
      %50 = sbr.rel (0) target = $region33
    $region32: #{tpu_custom_call.1} parent=1 // pred_region
      %51 = dma.done [#allocation3], 8192
    $region33: #{tpu_custom_call.1} parent=1 // pred_fallthru
      _
    // Predicated region
    $region34: #{tpu_custom_call.1} parent=1 // pred_check
      _
    $region35: #{tpu_custom_call.1} parent=1 // pred_check_branch
      %53 = sbr.rel (0) target = $region37
    $region36: #{tpu_custom_call.1} parent=1 // pred_region
      %54 = dma.done [#allocation6], 8192
    $region37: #{tpu_custom_call.1} parent=1 // pred_fallthru
      _
    %v55 = vld [vmem:[%s0] sm:$0xff]
    %v56 = vld [vmem:[%s0 + $0x8] sm:$0xff]
    %v57 = vld [vmem:[%s1] sm:$0xff]
    %v58 = vld [vmem:[%s1 + $0x8] sm:$0xf]
    %v59 = vld [vmem:[#allocation2] sm:$0xff]
    %v60 = vld [vmem:[#allocation2 + $0x8] sm:$0xff]
    %v61 = vld [vmem:[#allocation2 + $0x10] sm:$0xff]
    %v62 = vld [vmem:[#allocation2 + $0x18] sm:$0xff]
    %v63 = vld [vmem:[#allocation2 + $0x20] sm:$0xff]
    %v64 = vld [vmem:[#allocation2 + $0x28] sm:$0xff]
    %v65 = vld [vmem:[#allocation2 + $0x30] sm:$0xff]
    %v66 = vld [vmem:[#allocation2 + $0x38] sm:$0xff]
    %v67 = vld [vmem:[#allocation2 + $0x40] sm:$0xff]
    %v68 = vld [vmem:[#allocation2 + $0x48] sm:$0xff]
    %v69 = vld [vmem:[#allocation2 + $0x50] sm:$0xff]
    %v70 = vld [vmem:[#allocation2 + $0x58] sm:$0xff]
    %v71 = vld [vmem:[#allocation2 + $0x60] sm:$0xff]
    %v72 = vld [vmem:[#allocation2 + $0x68] sm:$0xff]
    %v73 = vld [vmem:[#allocation2 + $0x70] sm:$0xff]
    %v74 = vld [vmem:[#allocation2 + $0x78] sm:$0xff]
    %v75 = vld [vmem:[%s3] sm:$0xf]
    %v77 = vlaneseq
    %v78 = vshrl.u32 %v77, 7
    %v79 = vsub.s32 0, %v78
    %v80 = vrot.slane %v75, %v79
    %v81 = vlaneseq
    %v82 = vshrl.u32 %v81, 7
    %v83 = vsub.s32 1, %v82
    %v84 = vrot.slane %v75, %v83
    %v85 = vlaneseq
    %v86 = vshrl.u32 %v85, 7
    %v87 = vsub.s32 2, %v86
    %v88 = vrot.slane %v75, %v87
    %v89 = vlaneseq
    %v90 = vshrl.u32 %v89, 7
    %v91 = vsub.s32 3, %v90
    %v92 = vrot.slane %v75, %v91
    %vm97 = vcmask 261120
    %v99 = vsel %vm97, %v55, 0
    %v102 = vsel %vm97, %v56, 0
    %104 = vmatprep.subr.mxu0 0.0
    %105 = vmatpush1.msra.mxu0 0.0
    %106 = vmatprep.subr.mxu0 0.0
    %107 = vmatpush1.msra.mxu0 0.0
    %108 = vmatprep.subr.mxu0 0.0
    %109 = vmatpush1.msra.mxu0 0.0
    %110 = vmatprep.subr.mxu0 0.0
    %111 = vmatpush1.msra.mxu0 0.0
    %112 = vmatprep.subr.mxu0 0.0
    %113 = vmatpush1.msra.mxu0 0.0
    %114 = vmatprep.subr.mxu0 0.0
    %115 = vmatpush1.msra.mxu0 0.0
    %116 = vmatprep.subr.mxu0 0.0
    %117 = vmatpush1.msra.mxu0 0.0
    %118 = vmatprep.subr.mxu0 0.0
    %119 = vmatpush1.msra.mxu0 0.0
    %120 = vmatprep.subr.mxu0 0.0
    %121 = vmatpush1.msra.mxu0 0.0
    %122 = vmatprep.subr.mxu0 0.0
    %123 = vmatpush1.msra.mxu0 0.0
    %124 = vmatprep.subr.mxu0 0.0
    %125 = vmatpush1.msra.mxu0 0.0
    %126 = vmatprep.subr.mxu0 0.0
    %127 = vmatpush1.msra.mxu0 0.0
    %128 = vmatprep.subr.mxu0 %v72
    %129 = vmatpush1.msra.mxu0 %v71
    %130 = vmatprep.subr.mxu0 %v68
    %131 = vmatpush1.msra.mxu0 %v67
    %132 = vmatprep.subr.mxu0 %v64
    %133 = vmatpush1.msra.mxu0 %v63
    %134 = vmatprep.subr.mxu0 %v60
    %135 = vmatpush1.msra.mxu0 %v59
    %136 = vmatprep.subr.mxu0 0.0
    %137 = vmatpush2.msra.mxu0 0.0
    %138 = vmatprep.subr.mxu0 0.0
    %139 = vmatpush2.msra.mxu0 0.0
    %140 = vmatprep.subr.mxu0 0.0
    %141 = vmatpush2.msra.mxu0 0.0
    %142 = vmatprep.subr.mxu0 0.0
    %143 = vmatpush2.msra.mxu0 0.0
    %144 = vmatprep.subr.mxu0 0.0
    %145 = vmatpush2.msra.mxu0 0.0
    %146 = vmatprep.subr.mxu0 0.0
    %147 = vmatpush2.msra.mxu0 0.0
    %148 = vmatprep.subr.mxu0 0.0
    %149 = vmatpush2.msra.mxu0 0.0
    %150 = vmatprep.subr.mxu0 0.0
    %151 = vmatpush2.msra.mxu0 0.0
    %152 = vmatprep.subr.mxu0 0.0
    %153 = vmatpush2.msra.mxu0 0.0
    %154 = vmatprep.subr.mxu0 0.0
    %155 = vmatpush2.msra.mxu0 0.0
    %156 = vmatprep.subr.mxu0 0.0
    %157 = vmatpush2.msra.mxu0 0.0
    %158 = vmatprep.subr.mxu0 0.0
    %159 = vmatpush2.msra.mxu0 0.0
    %160 = vmatprep.subr.mxu0 0.0
    %161 = vmatpush2.msra.mxu0 0.0
    %162 = vmatprep.subr.mxu0 0.0
    %163 = vmatpush2.msra.mxu0 0.0
    %164 = vmatprep.subr.mxu0 0.0
    %165 = vmatpush2.msra.mxu0 0.0
    %166 = vmatprep.subr.mxu0 0.0
    %167 = vmatpush2.msra.mxu0 0.0
    %168 = vmatprep.mubr.f32.mxu0 0.0
    %169 = vmatmul.mubr.f32.gmra.mxu0 %v99
    %v170 = vpop.f32.mrf.mxu0
    %v171 = vadd.f32 %v80, %v170
    %v172 = vpop.f32.mrf.mxu0
    %v173 = vadd.f32 %v84, %v172
    %174 = vmatprep.mubr.f32.mxu0 0.0
    %175 = vmatmul.mubr.f32.gmra.mxu0 %v102
    %v176 = vpop.f32.mrf.mxu0
    %v177 = vadd.f32 %v80, %v176
    %v178 = vpop.f32.mrf.mxu0
    %v179 = vadd.f32 %v84, %v178
    %180 = vdwg.mxu0
    %181 = vmatprep.subr.mxu0 0.0
    %182 = vmatpush1.msra.mxu0 0.0
    %183 = vmatprep.subr.mxu0 0.0
    %184 = vmatpush1.msra.mxu0 0.0
    %185 = vmatprep.subr.mxu0 0.0
    %186 = vmatpush1.msra.mxu0 0.0
    %187 = vmatprep.subr.mxu0 0.0
    %188 = vmatpush1.msra.mxu0 0.0
    %189 = vmatprep.subr.mxu0 0.0
    %190 = vmatpush1.msra.mxu0 0.0
    %191 = vmatprep.subr.mxu0 0.0
    %192 = vmatpush1.msra.mxu0 0.0
    %193 = vmatprep.subr.mxu0 0.0
    %194 = vmatpush1.msra.mxu0 0.0
    %195 = vmatprep.subr.mxu0 0.0
    %196 = vmatpush1.msra.mxu0 0.0
    %197 = vmatprep.subr.mxu0 0.0
    %198 = vmatpush1.msra.mxu0 0.0
    %199 = vmatprep.subr.mxu0 0.0
    %200 = vmatpush1.msra.mxu0 0.0
    %201 = vmatprep.subr.mxu0 0.0
    %202 = vmatpush1.msra.mxu0 0.0
    %203 = vmatprep.subr.mxu0 0.0
    %204 = vmatpush1.msra.mxu0 0.0
    %205 = vmatprep.subr.mxu0 %v74
    %206 = vmatpush1.msra.mxu0 %v73
    %207 = vmatprep.subr.mxu0 %v70
    %208 = vmatpush1.msra.mxu0 %v69
    %209 = vmatprep.subr.mxu0 %v66
    %210 = vmatpush1.msra.mxu0 %v65
    %211 = vmatprep.subr.mxu0 %v62
    %212 = vmatpush1.msra.mxu0 %v61
    %213 = vmatprep.subr.mxu0 0.0
    %214 = vmatpush2.msra.mxu0 0.0
    %215 = vmatprep.subr.mxu0 0.0
    %216 = vmatpush2.msra.mxu0 0.0
    %217 = vmatprep.subr.mxu0 0.0
    %218 = vmatpush2.msra.mxu0 0.0
    %219 = vmatprep.subr.mxu0 0.0
    %220 = vmatpush2.msra.mxu0 0.0
    %221 = vmatprep.subr.mxu0 0.0
    %222 = vmatpush2.msra.mxu0 0.0
    %223 = vmatprep.subr.mxu0 0.0
    %224 = vmatpush2.msra.mxu0 0.0
    %225 = vmatprep.subr.mxu0 0.0
    %226 = vmatpush2.msra.mxu0 0.0
    %227 = vmatprep.subr.mxu0 0.0
    %228 = vmatpush2.msra.mxu0 0.0
    %229 = vmatprep.subr.mxu0 0.0
    %230 = vmatpush2.msra.mxu0 0.0
    %231 = vmatprep.subr.mxu0 0.0
    %232 = vmatpush2.msra.mxu0 0.0
    %233 = vmatprep.subr.mxu0 0.0
    %234 = vmatpush2.msra.mxu0 0.0
    %235 = vmatprep.subr.mxu0 0.0
    %236 = vmatpush2.msra.mxu0 0.0
    %237 = vmatprep.subr.mxu0 0.0
    %238 = vmatpush2.msra.mxu0 0.0
    %239 = vmatprep.subr.mxu0 0.0
    %240 = vmatpush2.msra.mxu0 0.0
    %241 = vmatprep.subr.mxu0 0.0
    %242 = vmatpush2.msra.mxu0 0.0
    %243 = vmatprep.subr.mxu0 0.0
    %244 = vmatpush2.msra.mxu0 0.0
    %245 = vmatprep.mubr.f32.mxu0 0.0
    %246 = vmatmul.mubr.f32.gmra.mxu0 %v99
    %v247 = vpop.f32.mrf.mxu0
    %v248 = vadd.f32 %v88, %v247
    %v249 = vpop.f32.mrf.mxu0
    %v250 = vadd.f32 %v92, %v249
    %251 = vmatprep.mubr.f32.mxu0 0.0
    %252 = vmatmul.mubr.f32.gmra.mxu0 %v102
    %v253 = vpop.f32.mrf.mxu0
    %v254 = vadd.f32 %v88, %v253
    %v255 = vpop.f32.mrf.mxu0
    %v256 = vadd.f32 %v92, %v255
    %257 = vdwg.mxu0
    %s258 = scalar_lea.vmem [#allocation2], 256
    %v259 = vld [vmem:[%s258] sm:$0xff]
    %v260 = vld [vmem:[%s258 + $0x8] sm:$0xff]
    %v261 = vld [vmem:[%s258 + $0x10] sm:$0xff]
    %v262 = vld [vmem:[%s258 + $0x18] sm:$0xff]
    %v263 = vld [vmem:[%s258 + $0x20] sm:$0xff]
    %v264 = vld [vmem:[%s258 + $0x28] sm:$0xff]
    %v265 = vld [vmem:[%s258 + $0x30] sm:$0xff]
    %v266 = vld [vmem:[%s258 + $0x38] sm:$0xff]
    %v267 = vld [vmem:[%s258 + $0x40] sm:$0xff]
    %v268 = vld [vmem:[%s258 + $0x48] sm:$0xff]
    %v269 = vld [vmem:[%s258 + $0x50] sm:$0xff]
    %v270 = vld [vmem:[%s258 + $0x58] sm:$0xff]
    %v271 = vld [vmem:[%s258 + $0x60] sm:$0xff]
    %v272 = vld [vmem:[%s258 + $0x68] sm:$0xff]
    %v273 = vld [vmem:[%s258 + $0x70] sm:$0xff]
    %v274 = vld [vmem:[%s258 + $0x78] sm:$0xff]
    %s275 = scalar_lea.vmem %s3, 8
    %v276 = vld [vmem:[%s275] sm:$0xf]
    %v278 = vlaneseq
    %v279 = vshrl.u32 %v278, 7
    %v280 = vsub.s32 0, %v279
    %v281 = vrot.slane %v276, %v280
    %v282 = vlaneseq
    %v283 = vshrl.u32 %v282, 7
    %v284 = vsub.s32 1, %v283
    %v285 = vrot.slane %v276, %v284
    %v286 = vlaneseq
    %v287 = vshrl.u32 %v286, 7
    %v288 = vsub.s32 2, %v287
    %v289 = vrot.slane %v276, %v288
    %v290 = vlaneseq
    %v291 = vshrl.u32 %v290, 7
    %v292 = vsub.s32 3, %v291
    %v293 = vrot.slane %v276, %v292
    %v299 = vsel %vm97, %v57, 0
    %v302 = vsel %vm97, %v58, 0
    %304 = vmatprep.subr.mxu0 0.0
    %305 = vmatpush1.msra.mxu0 0.0
    %306 = vmatprep.subr.mxu0 0.0
    %307 = vmatpush1.msra.mxu0 0.0
    %308 = vmatprep.subr.mxu0 0.0
    %309 = vmatpush1.msra.mxu0 0.0
    %310 = vmatprep.subr.mxu0 0.0
    %311 = vmatpush1.msra.mxu0 0.0
    %312 = vmatprep.subr.mxu0 0.0
    %313 = vmatpush1.msra.mxu0 0.0
    %314 = vmatprep.subr.mxu0 0.0
    %315 = vmatpush1.msra.mxu0 0.0
    %316 = vmatprep.subr.mxu0 0.0
    %317 = vmatpush1.msra.mxu0 0.0
    %318 = vmatprep.subr.mxu0 0.0
    %319 = vmatpush1.msra.mxu0 0.0
    %320 = vmatprep.subr.mxu0 0.0
    %321 = vmatpush1.msra.mxu0 0.0
    %322 = vmatprep.subr.mxu0 0.0
    %323 = vmatpush1.msra.mxu0 0.0
    %324 = vmatprep.subr.mxu0 0.0
    %325 = vmatpush1.msra.mxu0 0.0
    %326 = vmatprep.subr.mxu0 0.0
    %327 = vmatpush1.msra.mxu0 0.0
    %328 = vmatprep.subr.mxu0 %v272
    %329 = vmatpush1.msra.mxu0 %v271
    %330 = vmatprep.subr.mxu0 %v268
    %331 = vmatpush1.msra.mxu0 %v267
    %332 = vmatprep.subr.mxu0 %v264
    %333 = vmatpush1.msra.mxu0 %v263
    %334 = vmatprep.subr.mxu0 %v260
    %335 = vmatpush1.msra.mxu0 %v259
    %336 = vmatprep.subr.mxu0 0.0
    %337 = vmatpush2.msra.mxu0 0.0
    %338 = vmatprep.subr.mxu0 0.0
    %339 = vmatpush2.msra.mxu0 0.0
    %340 = vmatprep.subr.mxu0 0.0
    %341 = vmatpush2.msra.mxu0 0.0
    %342 = vmatprep.subr.mxu0 0.0
    %343 = vmatpush2.msra.mxu0 0.0
    %344 = vmatprep.subr.mxu0 0.0
    %345 = vmatpush2.msra.mxu0 0.0
    %346 = vmatprep.subr.mxu0 0.0
    %347 = vmatpush2.msra.mxu0 0.0
    %348 = vmatprep.subr.mxu0 0.0
    %349 = vmatpush2.msra.mxu0 0.0
    %350 = vmatprep.subr.mxu0 0.0
    %351 = vmatpush2.msra.mxu0 0.0
    %352 = vmatprep.subr.mxu0 0.0
    %353 = vmatpush2.msra.mxu0 0.0
    %354 = vmatprep.subr.mxu0 0.0
    %355 = vmatpush2.msra.mxu0 0.0
    %356 = vmatprep.subr.mxu0 0.0
    %357 = vmatpush2.msra.mxu0 0.0
    %358 = vmatprep.subr.mxu0 0.0
    %359 = vmatpush2.msra.mxu0 0.0
    %360 = vmatprep.subr.mxu0 0.0
    %361 = vmatpush2.msra.mxu0 0.0
    %362 = vmatprep.subr.mxu0 0.0
    %363 = vmatpush2.msra.mxu0 0.0
    %364 = vmatprep.subr.mxu0 0.0
    %365 = vmatpush2.msra.mxu0 0.0
    %366 = vmatprep.subr.mxu0 0.0
    %367 = vmatpush2.msra.mxu0 0.0
    %368 = vmatprep.mubr.f32.mxu0 0.0
    %369 = vmatmul.mubr.f32.gmra.mxu0 %v299
    %v370 = vpop.f32.mrf.mxu0
    %v371 = vadd.f32 %v281, %v370
    %v372 = vpop.f32.mrf.mxu0
    %v373 = vadd.f32 %v285, %v372
    %374 = vmatprep.mubr.f32.mxu0 0.0
    %375 = vmatmul.mubr.f32.gmra.mxu0 %v302
    %v376 = vpop.f32.mrf.mxu0
    %v377 = vadd.f32 %v281, %v376
    %v378 = vpop.f32.mrf.mxu0
    %v379 = vadd.f32 %v285, %v378
    %380 = vdwg.mxu0
    %381 = vmatprep.subr.mxu0 0.0
    %382 = vmatpush1.msra.mxu0 0.0
    %383 = vmatprep.subr.mxu0 0.0
    %384 = vmatpush1.msra.mxu0 0.0
    %385 = vmatprep.subr.mxu0 0.0
    %386 = vmatpush1.msra.mxu0 0.0
    %387 = vmatprep.subr.mxu0 0.0
    %388 = vmatpush1.msra.mxu0 0.0
    %389 = vmatprep.subr.mxu0 0.0
    %390 = vmatpush1.msra.mxu0 0.0
    %391 = vmatprep.subr.mxu0 0.0
    %392 = vmatpush1.msra.mxu0 0.0
    %393 = vmatprep.subr.mxu0 0.0
    %394 = vmatpush1.msra.mxu0 0.0
    %395 = vmatprep.subr.mxu0 0.0
    %396 = vmatpush1.msra.mxu0 0.0
    %397 = vmatprep.subr.mxu0 0.0
    %398 = vmatpush1.msra.mxu0 0.0
    %399 = vmatprep.subr.mxu0 0.0
    %400 = vmatpush1.msra.mxu0 0.0
    %401 = vmatprep.subr.mxu0 0.0
    %402 = vmatpush1.msra.mxu0 0.0
    %403 = vmatprep.subr.mxu0 0.0
    %404 = vmatpush1.msra.mxu0 0.0
    %405 = vmatprep.subr.mxu0 %v274
    %406 = vmatpush1.msra.mxu0 %v273
    %407 = vmatprep.subr.mxu0 %v270
    %408 = vmatpush1.msra.mxu0 %v269
    %409 = vmatprep.subr.mxu0 %v266
    %410 = vmatpush1.msra.mxu0 %v265
    %411 = vmatprep.subr.mxu0 %v262
    %412 = vmatpush1.msra.mxu0 %v261
    %413 = vmatprep.subr.mxu0 0.0
    %414 = vmatpush2.msra.mxu0 0.0
    %415 = vmatprep.subr.mxu0 0.0
    %416 = vmatpush2.msra.mxu0 0.0
    %417 = vmatprep.subr.mxu0 0.0
    %418 = vmatpush2.msra.mxu0 0.0
    %419 = vmatprep.subr.mxu0 0.0
    %420 = vmatpush2.msra.mxu0 0.0
    %421 = vmatprep.subr.mxu0 0.0
    %422 = vmatpush2.msra.mxu0 0.0
    %423 = vmatprep.subr.mxu0 0.0
    %424 = vmatpush2.msra.mxu0 0.0
    %425 = vmatprep.subr.mxu0 0.0
    %426 = vmatpush2.msra.mxu0 0.0
    %427 = vmatprep.subr.mxu0 0.0
    %428 = vmatpush2.msra.mxu0 0.0
    %429 = vmatprep.subr.mxu0 0.0
    %430 = vmatpush2.msra.mxu0 0.0
    %431 = vmatprep.subr.mxu0 0.0
    %432 = vmatpush2.msra.mxu0 0.0
    %433 = vmatprep.subr.mxu0 0.0
    %434 = vmatpush2.msra.mxu0 0.0
    %435 = vmatprep.subr.mxu0 0.0
    %436 = vmatpush2.msra.mxu0 0.0
    %437 = vmatprep.subr.mxu0 0.0
    %438 = vmatpush2.msra.mxu0 0.0
    %439 = vmatprep.subr.mxu0 0.0
    %440 = vmatpush2.msra.mxu0 0.0
    %441 = vmatprep.subr.mxu0 0.0
    %442 = vmatpush2.msra.mxu0 0.0
    %443 = vmatprep.subr.mxu0 0.0
    %444 = vmatpush2.msra.mxu0 0.0
    %445 = vmatprep.mubr.f32.mxu0 0.0
    %446 = vmatmul.mubr.f32.gmra.mxu0 %v299
    %v447 = vpop.f32.mrf.mxu0
    %v448 = vadd.f32 %v289, %v447
    %v449 = vpop.f32.mrf.mxu0
    %v450 = vadd.f32 %v293, %v449
    %451 = vmatprep.mubr.f32.mxu0 0.0
    %452 = vmatmul.mubr.f32.gmra.mxu0 %v302
    %v453 = vpop.f32.mrf.mxu0
    %v454 = vadd.f32 %v289, %v453
    %v455 = vpop.f32.mrf.mxu0
    %v456 = vadd.f32 %v293, %v455
    %457 = vdwg.mxu0
    %s458 = scalar_lea.vmem [#allocation2], 128
    %v459 = vld [vmem:[%s458] sm:$0xff]
    %v460 = vld [vmem:[%s458 + $0x8] sm:$0xff]
    %v461 = vld [vmem:[%s458 + $0x10] sm:$0xff]
    %v462 = vld [vmem:[%s458 + $0x18] sm:$0xff]
    %v463 = vld [vmem:[%s458 + $0x20] sm:$0xff]
    %v464 = vld [vmem:[%s458 + $0x28] sm:$0xff]
    %v465 = vld [vmem:[%s458 + $0x30] sm:$0xff]
    %v466 = vld [vmem:[%s458 + $0x38] sm:$0xff]
    %v467 = vld [vmem:[%s458 + $0x40] sm:$0xff]
    %v468 = vld [vmem:[%s458 + $0x48] sm:$0xff]
    %v469 = vld [vmem:[%s458 + $0x50] sm:$0xff]
    %v470 = vld [vmem:[%s458 + $0x58] sm:$0xff]
    %v471 = vld [vmem:[%s458 + $0x60] sm:$0xff]
    %v472 = vld [vmem:[%s458 + $0x68] sm:$0xff]
    %v473 = vld [vmem:[%s458 + $0x70] sm:$0xff]
    %v474 = vld [vmem:[%s458 + $0x78] sm:$0xff]
    %s475 = scalar_lea.vmem %s3, 4
    %v476 = vld [vmem:[%s475] sm:$0xf]
    %v478 = vlaneseq
    %v479 = vshrl.u32 %v478, 7
    %v480 = vsub.s32 0, %v479
    %v481 = vrot.slane %v476, %v480
    %v482 = vlaneseq
    %v483 = vshrl.u32 %v482, 7
    %v484 = vsub.s32 1, %v483
    %v485 = vrot.slane %v476, %v484
    %v486 = vlaneseq
    %v487 = vshrl.u32 %v486, 7
    %v488 = vsub.s32 2, %v487
    %v489 = vrot.slane %v476, %v488
    %v490 = vlaneseq
    %v491 = vshrl.u32 %v490, 7
    %v492 = vsub.s32 3, %v491
    %v493 = vrot.slane %v476, %v492
    %v498 = vrot.slane %v56, 6
    %v499 = vsel %vm97, %v498, 0
    %501 = vmatprep.subr.mxu0 0.0
    %502 = vmatpush1.msra.mxu0 0.0
    %503 = vmatprep.subr.mxu0 0.0
    %504 = vmatpush1.msra.mxu0 0.0
    %505 = vmatprep.subr.mxu0 0.0
    %506 = vmatpush1.msra.mxu0 0.0
    %507 = vmatprep.subr.mxu0 0.0
    %508 = vmatpush1.msra.mxu0 0.0
    %509 = vmatprep.subr.mxu0 0.0
    %510 = vmatpush1.msra.mxu0 0.0
    %511 = vmatprep.subr.mxu0 0.0
    %512 = vmatpush1.msra.mxu0 0.0
    %513 = vmatprep.subr.mxu0 0.0
    %514 = vmatpush1.msra.mxu0 0.0
    %515 = vmatprep.subr.mxu0 0.0
    %516 = vmatpush1.msra.mxu0 0.0
    %517 = vmatprep.subr.mxu0 0.0
    %518 = vmatpush1.msra.mxu0 0.0
    %519 = vmatprep.subr.mxu0 0.0
    %520 = vmatpush1.msra.mxu0 0.0
    %521 = vmatprep.subr.mxu0 0.0
    %522 = vmatpush1.msra.mxu0 0.0
    %523 = vmatprep.subr.mxu0 0.0
    %524 = vmatpush1.msra.mxu0 0.0
    %525 = vmatprep.subr.mxu0 %v472
    %526 = vmatpush1.msra.mxu0 %v471
    %527 = vmatprep.subr.mxu0 %v468
    %528 = vmatpush1.msra.mxu0 %v467
    %529 = vmatprep.subr.mxu0 %v464
    %530 = vmatpush1.msra.mxu0 %v463
    %531 = vmatprep.subr.mxu0 %v460
    %532 = vmatpush1.msra.mxu0 %v459
    %533 = vmatprep.subr.mxu0 0.0
    %534 = vmatpush2.msra.mxu0 0.0
    %535 = vmatprep.subr.mxu0 0.0
    %536 = vmatpush2.msra.mxu0 0.0
    %537 = vmatprep.subr.mxu0 0.0
    %538 = vmatpush2.msra.mxu0 0.0
    %539 = vmatprep.subr.mxu0 0.0
    %540 = vmatpush2.msra.mxu0 0.0
    %541 = vmatprep.subr.mxu0 0.0
    %542 = vmatpush2.msra.mxu0 0.0
    %543 = vmatprep.subr.mxu0 0.0
    %544 = vmatpush2.msra.mxu0 0.0
    %545 = vmatprep.subr.mxu0 0.0
    %546 = vmatpush2.msra.mxu0 0.0
    %547 = vmatprep.subr.mxu0 0.0
    %548 = vmatpush2.msra.mxu0 0.0
    %549 = vmatprep.subr.mxu0 0.0
    %550 = vmatpush2.msra.mxu0 0.0
    %551 = vmatprep.subr.mxu0 0.0
    %552 = vmatpush2.msra.mxu0 0.0
    %553 = vmatprep.subr.mxu0 0.0
    %554 = vmatpush2.msra.mxu0 0.0
    %555 = vmatprep.subr.mxu0 0.0
    %556 = vmatpush2.msra.mxu0 0.0
    %557 = vmatprep.subr.mxu0 0.0
    %558 = vmatpush2.msra.mxu0 0.0
    %559 = vmatprep.subr.mxu0 0.0
    %560 = vmatpush2.msra.mxu0 0.0
    %561 = vmatprep.subr.mxu0 0.0
    %562 = vmatpush2.msra.mxu0 0.0
    %563 = vmatprep.subr.mxu0 0.0
    %564 = vmatpush2.msra.mxu0 0.0
    %565 = vmatprep.mubr.f32.mxu0 0.0
    %566 = vmatmul.mubr.f32.gmra.mxu0 %v499
    %v567 = vpop.f32.mrf.mxu0
    %v568 = vadd.f32 %v481, %v567
    %v569 = vpop.f32.mrf.mxu0
    %v570 = vadd.f32 %v485, %v569
    %571 = vdwg.mxu0
    %572 = vmatprep.subr.mxu0 0.0
    %573 = vmatpush1.msra.mxu0 0.0
    %574 = vmatprep.subr.mxu0 0.0
    %575 = vmatpush1.msra.mxu0 0.0
    %576 = vmatprep.subr.mxu0 0.0
    %577 = vmatpush1.msra.mxu0 0.0
    %578 = vmatprep.subr.mxu0 0.0
    %579 = vmatpush1.msra.mxu0 0.0
    %580 = vmatprep.subr.mxu0 0.0
    %581 = vmatpush1.msra.mxu0 0.0
    %582 = vmatprep.subr.mxu0 0.0
    %583 = vmatpush1.msra.mxu0 0.0
    %584 = vmatprep.subr.mxu0 0.0
    %585 = vmatpush1.msra.mxu0 0.0
    %586 = vmatprep.subr.mxu0 0.0
    %587 = vmatpush1.msra.mxu0 0.0
    %588 = vmatprep.subr.mxu0 0.0
    %589 = vmatpush1.msra.mxu0 0.0
    %590 = vmatprep.subr.mxu0 0.0
    %591 = vmatpush1.msra.mxu0 0.0
    %592 = vmatprep.subr.mxu0 0.0
    %593 = vmatpush1.msra.mxu0 0.0
    %594 = vmatprep.subr.mxu0 0.0
    %595 = vmatpush1.msra.mxu0 0.0
    %596 = vmatprep.subr.mxu0 %v474
    %597 = vmatpush1.msra.mxu0 %v473
    %598 = vmatprep.subr.mxu0 %v470
    %599 = vmatpush1.msra.mxu0 %v469
    %600 = vmatprep.subr.mxu0 %v466
    %601 = vmatpush1.msra.mxu0 %v465
    %602 = vmatprep.subr.mxu0 %v462
    %603 = vmatpush1.msra.mxu0 %v461
    %604 = vmatprep.subr.mxu0 0.0
    %605 = vmatpush2.msra.mxu0 0.0
    %606 = vmatprep.subr.mxu0 0.0
    %607 = vmatpush2.msra.mxu0 0.0
    %608 = vmatprep.subr.mxu0 0.0
    %609 = vmatpush2.msra.mxu0 0.0
    %610 = vmatprep.subr.mxu0 0.0
    %611 = vmatpush2.msra.mxu0 0.0
    %612 = vmatprep.subr.mxu0 0.0
    %613 = vmatpush2.msra.mxu0 0.0
    %614 = vmatprep.subr.mxu0 0.0
    %615 = vmatpush2.msra.mxu0 0.0
    %616 = vmatprep.subr.mxu0 0.0
    %617 = vmatpush2.msra.mxu0 0.0
    %618 = vmatprep.subr.mxu0 0.0
    %619 = vmatpush2.msra.mxu0 0.0
    %620 = vmatprep.subr.mxu0 0.0
    %621 = vmatpush2.msra.mxu0 0.0
    %622 = vmatprep.subr.mxu0 0.0
    %623 = vmatpush2.msra.mxu0 0.0
    %624 = vmatprep.subr.mxu0 0.0
    %625 = vmatpush2.msra.mxu0 0.0
    %626 = vmatprep.subr.mxu0 0.0
    %627 = vmatpush2.msra.mxu0 0.0
    %628 = vmatprep.subr.mxu0 0.0
    %629 = vmatpush2.msra.mxu0 0.0
    %630 = vmatprep.subr.mxu0 0.0
    %631 = vmatpush2.msra.mxu0 0.0
    %632 = vmatprep.subr.mxu0 0.0
    %633 = vmatpush2.msra.mxu0 0.0
    %634 = vmatprep.subr.mxu0 0.0
    %635 = vmatpush2.msra.mxu0 0.0
    %636 = vmatprep.mubr.f32.mxu0 0.0
    %637 = vmatmul.mubr.f32.gmra.mxu0 %v499
    %v638 = vpop.f32.mrf.mxu0
    %v639 = vadd.f32 %v489, %v638
    %v640 = vpop.f32.mrf.mxu0
    %v641 = vadd.f32 %v493, %v640
    %642 = vdwg.mxu0
    %s643 = scalar_lea.vmem [#allocation2], 384
    %v644 = vld [vmem:[%s643] sm:$0xff]
    %v645 = vld [vmem:[%s643 + $0x8] sm:$0xff]
    %v646 = vld [vmem:[%s643 + $0x10] sm:$0xff]
    %v647 = vld [vmem:[%s643 + $0x18] sm:$0xff]
    %v648 = vld [vmem:[%s643 + $0x20] sm:$0xff]
    %v649 = vld [vmem:[%s643 + $0x28] sm:$0xff]
    %v650 = vld [vmem:[%s643 + $0x30] sm:$0xff]
    %v651 = vld [vmem:[%s643 + $0x38] sm:$0xff]
    %v652 = vld [vmem:[%s643 + $0x40] sm:$0xff]
    %v653 = vld [vmem:[%s643 + $0x48] sm:$0xff]
    %v654 = vld [vmem:[%s643 + $0x50] sm:$0xff]
    %v655 = vld [vmem:[%s643 + $0x58] sm:$0xff]
    %v656 = vld [vmem:[%s643 + $0x60] sm:$0xff]
    %v657 = vld [vmem:[%s643 + $0x68] sm:$0xff]
    %v658 = vld [vmem:[%s643 + $0x70] sm:$0xff]
    %v659 = vld [vmem:[%s643 + $0x78] sm:$0xff]
    %s660 = scalar_lea.vmem %s3, 12
    %v661 = vld [vmem:[%s660] sm:$0xf]
    %v663 = vlaneseq
    %v664 = vshrl.u32 %v663, 7
    %v665 = vsub.s32 0, %v664
    %v666 = vrot.slane %v661, %v665
    %v667 = vlaneseq
    %v668 = vshrl.u32 %v667, 7
    %v669 = vsub.s32 1, %v668
    %v670 = vrot.slane %v661, %v669
    %v671 = vlaneseq
    %v672 = vshrl.u32 %v671, 7
    %v673 = vsub.s32 2, %v672
    %v674 = vrot.slane %v661, %v673
    %v675 = vlaneseq
    %v676 = vshrl.u32 %v675, 7
    %v677 = vsub.s32 3, %v676
    %v678 = vrot.slane %v661, %v677
    %v683 = vrot.slane %v58, 2
    %v684 = vsel %vm97, %v683, 0
    %686 = vmatprep.subr.mxu0 0.0
    %687 = vmatpush1.msra.mxu0 0.0
    %688 = vmatprep.subr.mxu0 0.0
    %689 = vmatpush1.msra.mxu0 0.0
    %690 = vmatprep.subr.mxu0 0.0
    %691 = vmatpush1.msra.mxu0 0.0
    %692 = vmatprep.subr.mxu0 0.0
    %693 = vmatpush1.msra.mxu0 0.0
    %694 = vmatprep.subr.mxu0 0.0
    %695 = vmatpush1.msra.mxu0 0.0
    %696 = vmatprep.subr.mxu0 0.0
    %697 = vmatpush1.msra.mxu0 0.0
    %698 = vmatprep.subr.mxu0 0.0
    %699 = vmatpush1.msra.mxu0 0.0
    %700 = vmatprep.subr.mxu0 0.0
    %701 = vmatpush1.msra.mxu0 0.0
    %702 = vmatprep.subr.mxu0 0.0
    %703 = vmatpush1.msra.mxu0 0.0
    %704 = vmatprep.subr.mxu0 0.0
    %705 = vmatpush1.msra.mxu0 0.0
    %706 = vmatprep.subr.mxu0 0.0
    %707 = vmatpush1.msra.mxu0 0.0
    %708 = vmatprep.subr.mxu0 0.0
    %709 = vmatpush1.msra.mxu0 0.0
    %710 = vmatprep.subr.mxu0 %v657
    %711 = vmatpush1.msra.mxu0 %v656
    %712 = vmatprep.subr.mxu0 %v653
    %713 = vmatpush1.msra.mxu0 %v652
    %714 = vmatprep.subr.mxu0 %v649
    %715 = vmatpush1.msra.mxu0 %v648
    %716 = vmatprep.subr.mxu0 %v645
    %717 = vmatpush1.msra.mxu0 %v644
    %718 = vmatprep.subr.mxu0 0.0
    %719 = vmatpush2.msra.mxu0 0.0
    %720 = vmatprep.subr.mxu0 0.0
    %721 = vmatpush2.msra.mxu0 0.0
    %722 = vmatprep.subr.mxu0 0.0
    %723 = vmatpush2.msra.mxu0 0.0
    %724 = vmatprep.subr.mxu0 0.0
    %725 = vmatpush2.msra.mxu0 0.0
    %726 = vmatprep.subr.mxu0 0.0
    %727 = vmatpush2.msra.mxu0 0.0
    %728 = vmatprep.subr.mxu0 0.0
    %729 = vmatpush2.msra.mxu0 0.0
    %730 = vmatprep.subr.mxu0 0.0
    %731 = vmatpush2.msra.mxu0 0.0
    %732 = vmatprep.subr.mxu0 0.0
    %733 = vmatpush2.msra.mxu0 0.0
    %734 = vmatprep.subr.mxu0 0.0
    %735 = vmatpush2.msra.mxu0 0.0
    %736 = vmatprep.subr.mxu0 0.0
    %737 = vmatpush2.msra.mxu0 0.0
    %738 = vmatprep.subr.mxu0 0.0
    %739 = vmatpush2.msra.mxu0 0.0
    %740 = vmatprep.subr.mxu0 0.0
    %741 = vmatpush2.msra.mxu0 0.0
    %742 = vmatprep.subr.mxu0 0.0
    %743 = vmatpush2.msra.mxu0 0.0
    %744 = vmatprep.subr.mxu0 0.0
    %745 = vmatpush2.msra.mxu0 0.0
    %746 = vmatprep.subr.mxu0 0.0
    %747 = vmatpush2.msra.mxu0 0.0
    %748 = vmatprep.subr.mxu0 0.0
    %749 = vmatpush2.msra.mxu0 0.0
    %750 = vmatprep.mubr.f32.mxu0 0.0
    %751 = vmatmul.mubr.f32.gmra.mxu0 %v684
    %v752 = vpop.f32.mrf.mxu0
    %v753 = vadd.f32 %v666, %v752
    %v754 = vpop.f32.mrf.mxu0
    %v755 = vadd.f32 %v670, %v754
    %756 = vdwg.mxu0
    %757 = vmatprep.subr.mxu0 0.0
    %758 = vmatpush1.msra.mxu0 0.0
    %759 = vmatprep.subr.mxu0 0.0
    %760 = vmatpush1.msra.mxu0 0.0
    %761 = vmatprep.subr.mxu0 0.0
    %762 = vmatpush1.msra.mxu0 0.0
    %763 = vmatprep.subr.mxu0 0.0
    %764 = vmatpush1.msra.mxu0 0.0
    %765 = vmatprep.subr.mxu0 0.0
    %766 = vmatpush1.msra.mxu0 0.0
    %767 = vmatprep.subr.mxu0 0.0
    %768 = vmatpush1.msra.mxu0 0.0
    %769 = vmatprep.subr.mxu0 0.0
    %770 = vmatpush1.msra.mxu0 0.0
    %771 = vmatprep.subr.mxu0 0.0
    %772 = vmatpush1.msra.mxu0 0.0
    %773 = vmatprep.subr.mxu0 0.0
    %774 = vmatpush1.msra.mxu0 0.0
    %775 = vmatprep.subr.mxu0 0.0
    %776 = vmatpush1.msra.mxu0 0.0
    %777 = vmatprep.subr.mxu0 0.0
    %778 = vmatpush1.msra.mxu0 0.0
    %779 = vmatprep.subr.mxu0 0.0
    %780 = vmatpush1.msra.mxu0 0.0
    %781 = vmatprep.subr.mxu0 %v659
    %782 = vmatpush1.msra.mxu0 %v658
    %783 = vmatprep.subr.mxu0 %v655
    %784 = vmatpush1.msra.mxu0 %v654
    %785 = vmatprep.subr.mxu0 %v651
    %786 = vmatpush1.msra.mxu0 %v650
    %787 = vmatprep.subr.mxu0 %v647
    %788 = vmatpush1.msra.mxu0 %v646
    %789 = vmatprep.subr.mxu0 0.0
    %790 = vmatpush2.msra.mxu0 0.0
    %791 = vmatprep.subr.mxu0 0.0
    %792 = vmatpush2.msra.mxu0 0.0
    %793 = vmatprep.subr.mxu0 0.0
    %794 = vmatpush2.msra.mxu0 0.0
    %795 = vmatprep.subr.mxu0 0.0
    %796 = vmatpush2.msra.mxu0 0.0
    %797 = vmatprep.subr.mxu0 0.0
    %798 = vmatpush2.msra.mxu0 0.0
    %799 = vmatprep.subr.mxu0 0.0
    %800 = vmatpush2.msra.mxu0 0.0
    %801 = vmatprep.subr.mxu0 0.0
    %802 = vmatpush2.msra.mxu0 0.0
    %803 = vmatprep.subr.mxu0 0.0
    %804 = vmatpush2.msra.mxu0 0.0
    %805 = vmatprep.subr.mxu0 0.0
    %806 = vmatpush2.msra.mxu0 0.0
    %807 = vmatprep.subr.mxu0 0.0
    %808 = vmatpush2.msra.mxu0 0.0
    %809 = vmatprep.subr.mxu0 0.0
    %810 = vmatpush2.msra.mxu0 0.0
    %811 = vmatprep.subr.mxu0 0.0
    %812 = vmatpush2.msra.mxu0 0.0
    %813 = vmatprep.subr.mxu0 0.0
    %814 = vmatpush2.msra.mxu0 0.0
    %815 = vmatprep.subr.mxu0 0.0
    %816 = vmatpush2.msra.mxu0 0.0
    %817 = vmatprep.subr.mxu0 0.0
    %818 = vmatpush2.msra.mxu0 0.0
    %819 = vmatprep.subr.mxu0 0.0
    %820 = vmatpush2.msra.mxu0 0.0
    %821 = vmatprep.mubr.f32.mxu0 0.0
    %822 = vmatmul.mubr.f32.gmra.mxu0 %v684
    %v823 = vpop.f32.mrf.mxu0
    %v824 = vadd.f32 %v674, %v823
    %v825 = vpop.f32.mrf.mxu0
    %v826 = vadd.f32 %v678, %v825
    %827 = vdwg.mxu0
    %v832 = vrot.slane %v371, 4
    %v833 = vrot.slane %v373, 4
    %v834 = vrot.slane %v448, 4
    %v835 = vrot.slane %v450, 4
    %v840 = vadd.f32 %v171, %v832
    %v841 = vadd.f32 %v173, %v833
    %v842 = vadd.f32 %v248, %v834
    %v843 = vadd.f32 %v250, %v835
    %v844 = vadd.f32 %v177, %v832
    %v845 = vadd.f32 %v179, %v833
    %v846 = vadd.f32 %v254, %v834
    %v847 = vadd.f32 %v256, %v835
    %v852 = vrot.slane %v377, 4
    %v853 = vrot.slane %v379, 4
    %v854 = vrot.slane %v454, 4
    %v855 = vrot.slane %v456, 4
    %v860 = vadd.f32 %v177, %v852
    %v861 = vadd.f32 %v179, %v853
    %v862 = vadd.f32 %v254, %v854
    %v863 = vadd.f32 %v256, %v855
    %v868 = vrot.slane %v568, 2
    %v869 = vrot.slane %v570, 2
    %v870 = vrot.slane %v639, 2
    %v871 = vrot.slane %v641, 2
    %v876 = vadd.f32 %v860, %v868
    %v877 = vadd.f32 %v861, %v869
    %v878 = vadd.f32 %v862, %v870
    %v879 = vadd.f32 %v863, %v871
    %v884 = vrot.slane %v753, 2
    %v885 = vrot.slane %v755, 2
    %v886 = vrot.slane %v824, 2
    %v887 = vrot.slane %v826, 2
    %v892 = vadd.f32 %v876, %v884
    %v893 = vadd.f32 %v877, %v885
    %v894 = vadd.f32 %v878, %v886
    %v895 = vadd.f32 %v879, %v887
    %v896 = vld [vmem:[#allocation5] sm:$0xff]
    %v897 = vld [vmem:[#allocation5 + $0x8] sm:$0xff]
    %v898 = vld [vmem:[#allocation5 + $0x10] sm:$0xff]
    %v899 = vld [vmem:[#allocation5 + $0x18] sm:$0xff]
    %v900 = vld [vmem:[#allocation5 + $0x20] sm:$0xff]
    %v901 = vld [vmem:[#allocation5 + $0x28] sm:$0xff]
    %v902 = vld [vmem:[#allocation5 + $0x30] sm:$0xff]
    %v903 = vld [vmem:[#allocation5 + $0x38] sm:$0xff]
    %v904 = vld [vmem:[#allocation5 + $0x40] sm:$0xff]
    %v905 = vld [vmem:[#allocation5 + $0x48] sm:$0xff]
    %v906 = vld [vmem:[#allocation5 + $0x50] sm:$0xff]
    %v907 = vld [vmem:[#allocation5 + $0x58] sm:$0xff]
    %v908 = vld [vmem:[#allocation5 + $0x60] sm:$0xff]
    %v909 = vld [vmem:[#allocation5 + $0x68] sm:$0xff]
    %v910 = vld [vmem:[#allocation5 + $0x70] sm:$0xff]
    %v911 = vld [vmem:[#allocation5 + $0x78] sm:$0xff]
    %v912 = vld [vmem:[#allocation5 + $0x80] sm:$0xff]
    %v913 = vld [vmem:[#allocation5 + $0x88] sm:$0xff]
    %v914 = vld [vmem:[#allocation5 + $0x90] sm:$0xff]
    %v915 = vld [vmem:[#allocation5 + $0x98] sm:$0xff]
    %v916 = vld [vmem:[#allocation5 + $0xa0] sm:$0xff]
    %v917 = vld [vmem:[#allocation5 + $0xa8] sm:$0xff]
    %v918 = vld [vmem:[#allocation5 + $0xb0] sm:$0xff]
    %v919 = vld [vmem:[#allocation5 + $0xb8] sm:$0xff]
    %v920 = vld [vmem:[#allocation5 + $0xc0] sm:$0xff]
    %v921 = vld [vmem:[#allocation5 + $0xc8] sm:$0xff]
    %v922 = vld [vmem:[#allocation5 + $0xd0] sm:$0xff]
    %v923 = vld [vmem:[#allocation5 + $0xd8] sm:$0xff]
    %v924 = vld [vmem:[#allocation5 + $0xe0] sm:$0xff]
    %v925 = vld [vmem:[#allocation5 + $0xe8] sm:$0xff]
    %v926 = vld [vmem:[#allocation5 + $0xf0] sm:$0xff]
    %v927 = vld [vmem:[#allocation5 + $0xf8] sm:$0xff]
    %v928 = vld [vmem:[#allocation5 + $0x100] sm:$0xff]
    %v929 = vld [vmem:[#allocation5 + $0x108] sm:$0xff]
    %v930 = vld [vmem:[#allocation5 + $0x110] sm:$0xff]
    %v931 = vld [vmem:[#allocation5 + $0x118] sm:$0xff]
    %v932 = vld [vmem:[#allocation5 + $0x120] sm:$0xff]
    %v933 = vld [vmem:[#allocation5 + $0x128] sm:$0xff]
    %v934 = vld [vmem:[#allocation5 + $0x130] sm:$0xff]
    %v935 = vld [vmem:[#allocation5 + $0x138] sm:$0xff]
    %v936 = vld [vmem:[#allocation5 + $0x140] sm:$0xff]
    %v937 = vld [vmem:[#allocation5 + $0x148] sm:$0xff]
    %v938 = vld [vmem:[#allocation5 + $0x150] sm:$0xff]
    %v939 = vld [vmem:[#allocation5 + $0x158] sm:$0xff]
    %v940 = vld [vmem:[#allocation5 + $0x160] sm:$0xff]
    %v941 = vld [vmem:[#allocation5 + $0x168] sm:$0xff]
    %v942 = vld [vmem:[#allocation5 + $0x170] sm:$0xff]
    %v943 = vld [vmem:[#allocation5 + $0x178] sm:$0xff]
    %v944 = vld [vmem:[#allocation5 + $0x180] sm:$0xff]
    %v945 = vld [vmem:[#allocation5 + $0x188] sm:$0xff]
    %v946 = vld [vmem:[#allocation5 + $0x190] sm:$0xff]
    %v947 = vld [vmem:[#allocation5 + $0x198] sm:$0xff]
    %v948 = vld [vmem:[#allocation5 + $0x1a0] sm:$0xff]
    %v949 = vld [vmem:[#allocation5 + $0x1a8] sm:$0xff]
    %v950 = vld [vmem:[#allocation5 + $0x1b0] sm:$0xff]
    %v951 = vld [vmem:[#allocation5 + $0x1b8] sm:$0xff]
    %v952 = vld [vmem:[#allocation5 + $0x1c0] sm:$0xff]
    %v953 = vld [vmem:[#allocation5 + $0x1c8] sm:$0xff]
    %v954 = vld [vmem:[#allocation5 + $0x1d0] sm:$0xff]
    %v955 = vld [vmem:[#allocation5 + $0x1d8] sm:$0xff]
    %v956 = vld [vmem:[#allocation5 + $0x1e0] sm:$0xff]
    %v957 = vld [vmem:[#allocation5 + $0x1e8] sm:$0xff]
    %v958 = vld [vmem:[#allocation5 + $0x1f0] sm:$0xff]
    %v959 = vld [vmem:[#allocation5 + $0x1f8] sm:$0xff]
    %960 = vmatprep.subr.mxu0 %v957
    %961 = vmatpush1.msra.mxu0 %v956
    %962 = vmatprep.subr.mxu0 %v953
    %963 = vmatpush1.msra.mxu0 %v952
    %964 = vmatprep.subr.mxu0 %v949
    %965 = vmatpush1.msra.mxu0 %v948
    %966 = vmatprep.subr.mxu0 %v945
    %967 = vmatpush1.msra.mxu0 %v944
    %968 = vmatprep.subr.mxu0 %v941
    %969 = vmatpush1.msra.mxu0 %v940
    %970 = vmatprep.subr.mxu0 %v937
    %971 = vmatpush1.msra.mxu0 %v936
    %972 = vmatprep.subr.mxu0 %v933
    %973 = vmatpush1.msra.mxu0 %v932
    %974 = vmatprep.subr.mxu0 %v929
    %975 = vmatpush1.msra.mxu0 %v928
    %976 = vmatprep.subr.mxu0 %v925
    %977 = vmatpush1.msra.mxu0 %v924
    %978 = vmatprep.subr.mxu0 %v921
    %979 = vmatpush1.msra.mxu0 %v920
    %980 = vmatprep.subr.mxu0 %v917
    %981 = vmatpush1.msra.mxu0 %v916
    %982 = vmatprep.subr.mxu0 %v913
    %983 = vmatpush1.msra.mxu0 %v912
    %984 = vmatprep.subr.mxu0 %v909
    %985 = vmatpush1.msra.mxu0 %v908
    %986 = vmatprep.subr.mxu0 %v905
    %987 = vmatpush1.msra.mxu0 %v904
    %988 = vmatprep.subr.mxu0 %v901
    %989 = vmatpush1.msra.mxu0 %v900
    %990 = vmatprep.subr.mxu0 %v897
    %991 = vmatpush1.msra.mxu0 %v896
    %992 = vmatprep.subr.mxu0 0.0
    %993 = vmatpush2.msra.mxu0 0.0
    %994 = vmatprep.subr.mxu0 0.0
    %995 = vmatpush2.msra.mxu0 0.0
    %996 = vmatprep.subr.mxu0 0.0
    %997 = vmatpush2.msra.mxu0 0.0
    %998 = vmatprep.subr.mxu0 0.0
    %999 = vmatpush2.msra.mxu0 0.0
    %1000 = vmatprep.subr.mxu0 0.0
    %1001 = vmatpush2.msra.mxu0 0.0
    %1002 = vmatprep.subr.mxu0 0.0
    %1003 = vmatpush2.msra.mxu0 0.0
    %1004 = vmatprep.subr.mxu0 0.0
    %1005 = vmatpush2.msra.mxu0 0.0
    %1006 = vmatprep.subr.mxu0 0.0
    %1007 = vmatpush2.msra.mxu0 0.0
    %1008 = vmatprep.subr.mxu0 0.0
    %1009 = vmatpush2.msra.mxu0 0.0
    %1010 = vmatprep.subr.mxu0 0.0
    %1011 = vmatpush2.msra.mxu0 0.0
    %1012 = vmatprep.subr.mxu0 0.0
    %1013 = vmatpush2.msra.mxu0 0.0
    %1014 = vmatprep.subr.mxu0 0.0
    %1015 = vmatpush2.msra.mxu0 0.0
    %1016 = vmatprep.subr.mxu0 0.0
    %1017 = vmatpush2.msra.mxu0 0.0
    %1018 = vmatprep.subr.mxu0 0.0
    %1019 = vmatpush2.msra.mxu0 0.0
    %1020 = vmatprep.subr.mxu0 0.0
    %1021 = vmatpush2.msra.mxu0 0.0
    %1022 = vmatprep.subr.mxu0 0.0
    %1023 = vmatpush2.msra.mxu0 0.0
    %1024 = vmatprep.mubr.f32.mxu0 0.0
    %1025 = vmatmul.mubr.f32.gmra.mxu0 0.0
    %v1026 = vpop.f32.mrf.mxu0
    %v1027 = vadd.f32 0.0, %v1026
    %v1028 = vpop.f32.mrf.mxu0
    %v1029 = vadd.f32 0.0, %v1028
    %1030 = vdwg.mxu0
    %1031 = vmatprep.subr.mxu0 %v959
    %1032 = vmatpush1.msra.mxu0 %v958
    %1033 = vmatprep.subr.mxu0 %v955
    %1034 = vmatpush1.msra.mxu0 %v954
    %1035 = vmatprep.subr.mxu0 %v951
    %1036 = vmatpush1.msra.mxu0 %v950
    %1037 = vmatprep.subr.mxu0 %v947
    %1038 = vmatpush1.msra.mxu0 %v946
    %1039 = vmatprep.subr.mxu0 %v943
    %1040 = vmatpush1.msra.mxu0 %v942
    %1041 = vmatprep.subr.mxu0 %v939
    %1042 = vmatpush1.msra.mxu0 %v938
    %1043 = vmatprep.subr.mxu0 %v935
    %1044 = vmatpush1.msra.mxu0 %v934
    %1045 = vmatprep.subr.mxu0 %v931
    %1046 = vmatpush1.msra.mxu0 %v930
    %1047 = vmatprep.subr.mxu0 %v927
    %1048 = vmatpush1.msra.mxu0 %v926
    %1049 = vmatprep.subr.mxu0 %v923
    %1050 = vmatpush1.msra.mxu0 %v922
    %1051 = vmatprep.subr.mxu0 %v919
    %1052 = vmatpush1.msra.mxu0 %v918
    %1053 = vmatprep.subr.mxu0 %v915
    %1054 = vmatpush1.msra.mxu0 %v914
    %1055 = vmatprep.subr.mxu0 %v911
    %1056 = vmatpush1.msra.mxu0 %v910
    %1057 = vmatprep.subr.mxu0 %v907
    %1058 = vmatpush1.msra.mxu0 %v906
    %1059 = vmatprep.subr.mxu0 %v903
    %1060 = vmatpush1.msra.mxu0 %v902
    %1061 = vmatprep.subr.mxu0 %v899
    %1062 = vmatpush1.msra.mxu0 %v898
    %1063 = vmatprep.subr.mxu0 0.0
    %1064 = vmatpush2.msra.mxu0 0.0
    %1065 = vmatprep.subr.mxu0 0.0
    %1066 = vmatpush2.msra.mxu0 0.0
    %1067 = vmatprep.subr.mxu0 0.0
    %1068 = vmatpush2.msra.mxu0 0.0
    %1069 = vmatprep.subr.mxu0 0.0
    %1070 = vmatpush2.msra.mxu0 0.0
    %1071 = vmatprep.subr.mxu0 0.0
    %1072 = vmatpush2.msra.mxu0 0.0
    %1073 = vmatprep.subr.mxu0 0.0
    %1074 = vmatpush2.msra.mxu0 0.0
    %1075 = vmatprep.subr.mxu0 0.0
    %1076 = vmatpush2.msra.mxu0 0.0
    %1077 = vmatprep.subr.mxu0 0.0
    %1078 = vmatpush2.msra.mxu0 0.0
    %1079 = vmatprep.subr.mxu0 0.0
    %1080 = vmatpush2.msra.mxu0 0.0
    %1081 = vmatprep.subr.mxu0 0.0
    %1082 = vmatpush2.msra.mxu0 0.0
    %1083 = vmatprep.subr.mxu0 0.0
    %1084 = vmatpush2.msra.mxu0 0.0
    %1085 = vmatprep.subr.mxu0 0.0
    %1086 = vmatpush2.msra.mxu0 0.0
    %1087 = vmatprep.subr.mxu0 0.0
    %1088 = vmatpush2.msra.mxu0 0.0
    %1089 = vmatprep.subr.mxu0 0.0
    %1090 = vmatpush2.msra.mxu0 0.0
    %1091 = vmatprep.subr.mxu0 0.0
    %1092 = vmatpush2.msra.mxu0 0.0
    %1093 = vmatprep.subr.mxu0 0.0
    %1094 = vmatpush2.msra.mxu0 0.0
    %1095 = vmatprep.mubr.f32.mxu0 0.0
    %1096 = vmatmul.mubr.f32.gmra.mxu0 0.0
    %v1097 = vpop.f32.mrf.mxu0
    %v1098 = vadd.f32 0.0, %v1097
    %v1099 = vpop.f32.mrf.mxu0
    %v1100 = vadd.f32 0.0, %v1099
    %1101 = vdwg.mxu0
    %v1102 = vadd.f32 %v171, %v1027
    %v1103 = vadd.f32 %v173, %v1029
    %v1104 = vadd.f32 %v248, %v1098
    %v1105 = vadd.f32 %v250, %v1100
    %v1106 = vxor.u32 %v1102, 2147483648
    %v1107 = vmul.f32 %v1106, 1.442695
    %v1108 = vpow.pop %v1107
    %v1109 = vadd.f32 %v1108, 1.0
    %v1110 = vrcp.pop %v1109
    %v1111 = vmul.f32 1.0, %v1110
    %v1112 = vxor.u32 %v1103, 2147483648
    %v1113 = vmul.f32 %v1112, 1.442695
    %v1114 = vpow.pop %v1113
    %v1115 = vadd.f32 %v1114, 1.0
    %v1116 = vrcp.pop %v1115
    %v1117 = vmul.f32 1.0, %v1116
    %v1118 = vmul.f32 %v1111, %v1105
    %v1119 = vadd.f32 %v1104, %v1118
    %v1120 = vtanh.pop %v1119
    %v1121 = vsub.f32 1.0, %v1117
    %v1122 = vmul.f32 %v1121, %v1120
    %v1123 = vmul.f32 %v1117, 0.0
    %v1124 = vadd.f32 %v1122, %v1123
    %1125 = vmatprep.subr.mxu0 %v957
    %1126 = vmatpush1.msra.mxu0 %v956
    %1127 = vmatprep.subr.mxu0 %v953
    %1128 = vmatpush1.msra.mxu0 %v952
    %1129 = vmatprep.subr.mxu0 %v949
    %1130 = vmatpush1.msra.mxu0 %v948
    %1131 = vmatprep.subr.mxu0 %v945
    %1132 = vmatpush1.msra.mxu0 %v944
    %1133 = vmatprep.subr.mxu0 %v941
    %1134 = vmatpush1.msra.mxu0 %v940
    %1135 = vmatprep.subr.mxu0 %v937
    %1136 = vmatpush1.msra.mxu0 %v936
    %1137 = vmatprep.subr.mxu0 %v933
    %1138 = vmatpush1.msra.mxu0 %v932
    %1139 = vmatprep.subr.mxu0 %v929
    %1140 = vmatpush1.msra.mxu0 %v928
    %1141 = vmatprep.subr.mxu0 %v925
    %1142 = vmatpush1.msra.mxu0 %v924
    %1143 = vmatprep.subr.mxu0 %v921
    %1144 = vmatpush1.msra.mxu0 %v920
    %1145 = vmatprep.subr.mxu0 %v917
    %1146 = vmatpush1.msra.mxu0 %v916
    %1147 = vmatprep.subr.mxu0 %v913
    %1148 = vmatpush1.msra.mxu0 %v912
    %1149 = vmatprep.subr.mxu0 %v909
    %1150 = vmatpush1.msra.mxu0 %v908
    %1151 = vmatprep.subr.mxu0 %v905
    %1152 = vmatpush1.msra.mxu0 %v904
    %1153 = vmatprep.subr.mxu0 %v901
    %1154 = vmatpush1.msra.mxu0 %v900
    %1155 = vmatprep.subr.mxu0 %v897
    %1156 = vmatpush1.msra.mxu0 %v896
    %1157 = vmatprep.subr.mxu0 0.0
    %1158 = vmatpush2.msra.mxu0 0.0
    %1159 = vmatprep.subr.mxu0 0.0
    %1160 = vmatpush2.msra.mxu0 0.0
    %1161 = vmatprep.subr.mxu0 0.0
    %1162 = vmatpush2.msra.mxu0 0.0
    %1163 = vmatprep.subr.mxu0 0.0
    %1164 = vmatpush2.msra.mxu0 0.0
    %1165 = vmatprep.subr.mxu0 0.0
    %1166 = vmatpush2.msra.mxu0 0.0
    %1167 = vmatprep.subr.mxu0 0.0
    %1168 = vmatpush2.msra.mxu0 0.0
    %1169 = vmatprep.subr.mxu0 0.0
    %1170 = vmatpush2.msra.mxu0 0.0
    %1171 = vmatprep.subr.mxu0 0.0
    %1172 = vmatpush2.msra.mxu0 0.0
    %1173 = vmatprep.subr.mxu0 0.0
    %1174 = vmatpush2.msra.mxu0 0.0
    %1175 = vmatprep.subr.mxu0 0.0
    %1176 = vmatpush2.msra.mxu0 0.0
    %1177 = vmatprep.subr.mxu0 0.0
    %1178 = vmatpush2.msra.mxu0 0.0
    %1179 = vmatprep.subr.mxu0 0.0
    %1180 = vmatpush2.msra.mxu0 0.0
    %1181 = vmatprep.subr.mxu0 0.0
    %1182 = vmatpush2.msra.mxu0 0.0
    %1183 = vmatprep.subr.mxu0 0.0
    %1184 = vmatpush2.msra.mxu0 0.0
    %1185 = vmatprep.subr.mxu0 0.0
    %1186 = vmatpush2.msra.mxu0 0.0
    %1187 = vmatprep.subr.mxu0 0.0
    %1188 = vmatpush2.msra.mxu0 0.0
    %1189 = vmatprep.mubr.f32.mxu0 0.0
    %1190 = vmatmul.mubr.f32.gmra.mxu0 %v1124
    %v1191 = vpop.f32.mrf.mxu0
    %v1192 = vadd.f32 0.0, %v1191
    %v1193 = vpop.f32.mrf.mxu0
    %v1194 = vadd.f32 0.0, %v1193
    %1195 = vdwg.mxu0
    %1196 = vmatprep.subr.mxu0 %v959
    %1197 = vmatpush1.msra.mxu0 %v958
    %1198 = vmatprep.subr.mxu0 %v955
    %1199 = vmatpush1.msra.mxu0 %v954
    %1200 = vmatprep.subr.mxu0 %v951
    %1201 = vmatpush1.msra.mxu0 %v950
    %1202 = vmatprep.subr.mxu0 %v947
    %1203 = vmatpush1.msra.mxu0 %v946
    %1204 = vmatprep.subr.mxu0 %v943
    %1205 = vmatpush1.msra.mxu0 %v942
    %1206 = vmatprep.subr.mxu0 %v939
    %1207 = vmatpush1.msra.mxu0 %v938
    %1208 = vmatprep.subr.mxu0 %v935
    %1209 = vmatpush1.msra.mxu0 %v934
    %1210 = vmatprep.subr.mxu0 %v931
    %1211 = vmatpush1.msra.mxu0 %v930
    %1212 = vmatprep.subr.mxu0 %v927
    %1213 = vmatpush1.msra.mxu0 %v926
    %1214 = vmatprep.subr.mxu0 %v923
    %1215 = vmatpush1.msra.mxu0 %v922
    %1216 = vmatprep.subr.mxu0 %v919
    %1217 = vmatpush1.msra.mxu0 %v918
    %1218 = vmatprep.subr.mxu0 %v915
    %1219 = vmatpush1.msra.mxu0 %v914
    %1220 = vmatprep.subr.mxu0 %v911
    %1221 = vmatpush1.msra.mxu0 %v910
    %1222 = vmatprep.subr.mxu0 %v907
    %1223 = vmatpush1.msra.mxu0 %v906
    %1224 = vmatprep.subr.mxu0 %v903
    %1225 = vmatpush1.msra.mxu0 %v902
    %1226 = vmatprep.subr.mxu0 %v899
    %1227 = vmatpush1.msra.mxu0 %v898
    %1228 = vmatprep.subr.mxu0 0.0
    %1229 = vmatpush2.msra.mxu0 0.0
    %1230 = vmatprep.subr.mxu0 0.0
    %1231 = vmatpush2.msra.mxu0 0.0
    %1232 = vmatprep.subr.mxu0 0.0
    %1233 = vmatpush2.msra.mxu0 0.0
    %1234 = vmatprep.subr.mxu0 0.0
    %1235 = vmatpush2.msra.mxu0 0.0
    %1236 = vmatprep.subr.mxu0 0.0
    %1237 = vmatpush2.msra.mxu0 0.0
    %1238 = vmatprep.subr.mxu0 0.0
    %1239 = vmatpush2.msra.mxu0 0.0
    %1240 = vmatprep.subr.mxu0 0.0
    %1241 = vmatpush2.msra.mxu0 0.0
    %1242 = vmatprep.subr.mxu0 0.0
    %1243 = vmatpush2.msra.mxu0 0.0
    %1244 = vmatprep.subr.mxu0 0.0
    %1245 = vmatpush2.msra.mxu0 0.0
    %1246 = vmatprep.subr.mxu0 0.0
    %1247 = vmatpush2.msra.mxu0 0.0
    %1248 = vmatprep.subr.mxu0 0.0
    %1249 = vmatpush2.msra.mxu0 0.0
    %1250 = vmatprep.subr.mxu0 0.0
    %1251 = vmatpush2.msra.mxu0 0.0
    %1252 = vmatprep.subr.mxu0 0.0
    %1253 = vmatpush2.msra.mxu0 0.0
    %1254 = vmatprep.subr.mxu0 0.0
    %1255 = vmatpush2.msra.mxu0 0.0
    %1256 = vmatprep.subr.mxu0 0.0
    %1257 = vmatpush2.msra.mxu0 0.0
    %1258 = vmatprep.subr.mxu0 0.0
    %1259 = vmatpush2.msra.mxu0 0.0
    %1260 = vmatprep.mubr.f32.mxu0 0.0
    %1261 = vmatmul.mubr.f32.gmra.mxu0 %v1124
    %v1262 = vpop.f32.mrf.mxu0
    %v1263 = vadd.f32 0.0, %v1262
    %v1264 = vpop.f32.mrf.mxu0
    %v1265 = vadd.f32 0.0, %v1264
    %1266 = vdwg.mxu0
    %v1271 = vrot.slane %v1192, 6
    %v1272 = vrot.slane %v1194, 6
    %v1273 = vrot.slane %v1263, 6
    %v1274 = vrot.slane %v1265, 6
    %v1279 = vadd.f32 %v171, %v1271
    %v1280 = vadd.f32 %v173, %v1272
    %v1281 = vadd.f32 %v248, %v1273
    %v1282 = vadd.f32 %v250, %v1274
    %v1283 = vxor.u32 %v1279, 2147483648
    %v1284 = vmul.f32 %v1283, 1.442695
    %v1285 = vpow.pop %v1284
    %v1286 = vadd.f32 %v1285, 1.0
    %v1287 = vrcp.pop %v1286
    %v1288 = vmul.f32 1.0, %v1287
    %v1289 = vxor.u32 %v1280, 2147483648
    %v1290 = vmul.f32 %v1289, 1.442695
    %v1291 = vpow.pop %v1290
    %v1292 = vadd.f32 %v1291, 1.0
    %v1293 = vrcp.pop %v1292
    %v1294 = vmul.f32 1.0, %v1293
    %v1295 = vmul.f32 %v1288, %v1282
    %v1296 = vadd.f32 %v1281, %v1295
    %v1297 = vtanh.pop %v1296
    %v1298 = vsub.f32 1.0, %v1294
    %v1299 = vmul.f32 %v1298, %v1297
    %v1301 = vrot.slane %v1124, 6
    %v1303 = vmul.f32 %v1294, %v1301
    %v1304 = vadd.f32 %v1299, %v1303
    %v1306 = vrot.slane %v1304, 2
    %1308 = vmatprep.subr.mxu0 %v957
    %1309 = vmatpush1.msra.mxu0 %v956
    %1310 = vmatprep.subr.mxu0 %v953
    %1311 = vmatpush1.msra.mxu0 %v952
    %1312 = vmatprep.subr.mxu0 %v949
    %1313 = vmatpush1.msra.mxu0 %v948
    %1314 = vmatprep.subr.mxu0 %v945
    %1315 = vmatpush1.msra.mxu0 %v944
    %1316 = vmatprep.subr.mxu0 %v941
    %1317 = vmatpush1.msra.mxu0 %v940
    %1318 = vmatprep.subr.mxu0 %v937
    %1319 = vmatpush1.msra.mxu0 %v936
    %1320 = vmatprep.subr.mxu0 %v933
    %1321 = vmatpush1.msra.mxu0 %v932
    %1322 = vmatprep.subr.mxu0 %v929
    %1323 = vmatpush1.msra.mxu0 %v928
    %1324 = vmatprep.subr.mxu0 %v925
    %1325 = vmatpush1.msra.mxu0 %v924
    %1326 = vmatprep.subr.mxu0 %v921
    %1327 = vmatpush1.msra.mxu0 %v920
    %1328 = vmatprep.subr.mxu0 %v917
    %1329 = vmatpush1.msra.mxu0 %v916
    %1330 = vmatprep.subr.mxu0 %v913
    %1331 = vmatpush1.msra.mxu0 %v912
    %1332 = vmatprep.subr.mxu0 %v909
    %1333 = vmatpush1.msra.mxu0 %v908
    %1334 = vmatprep.subr.mxu0 %v905
    %1335 = vmatpush1.msra.mxu0 %v904
    %1336 = vmatprep.subr.mxu0 %v901
    %1337 = vmatpush1.msra.mxu0 %v900
    %1338 = vmatprep.subr.mxu0 %v897
    %1339 = vmatpush1.msra.mxu0 %v896
    %1340 = vmatprep.subr.mxu0 0.0
    %1341 = vmatpush2.msra.mxu0 0.0
    %1342 = vmatprep.subr.mxu0 0.0
    %1343 = vmatpush2.msra.mxu0 0.0
    %1344 = vmatprep.subr.mxu0 0.0
    %1345 = vmatpush2.msra.mxu0 0.0
    %1346 = vmatprep.subr.mxu0 0.0
    %1347 = vmatpush2.msra.mxu0 0.0
    %1348 = vmatprep.subr.mxu0 0.0
    %1349 = vmatpush2.msra.mxu0 0.0
    %1350 = vmatprep.subr.mxu0 0.0
    %1351 = vmatpush2.msra.mxu0 0.0
    %1352 = vmatprep.subr.mxu0 0.0
    %1353 = vmatpush2.msra.mxu0 0.0
    %1354 = vmatprep.subr.mxu0 0.0
    %1355 = vmatpush2.msra.mxu0 0.0
    %1356 = vmatprep.subr.mxu0 0.0
    %1357 = vmatpush2.msra.mxu0 0.0
    %1358 = vmatprep.subr.mxu0 0.0
    %1359 = vmatpush2.msra.mxu0 0.0
    %1360 = vmatprep.subr.mxu0 0.0
    %1361 = vmatpush2.msra.mxu0 0.0
    %1362 = vmatprep.subr.mxu0 0.0
    %1363 = vmatpush2.msra.mxu0 0.0
    %1364 = vmatprep.subr.mxu0 0.0
    %1365 = vmatpush2.msra.mxu0 0.0
    %1366 = vmatprep.subr.mxu0 0.0
    %1367 = vmatpush2.msra.mxu0 0.0
    %1368 = vmatprep.subr.mxu0 0.0
    %1369 = vmatpush2.msra.mxu0 0.0
    %1370 = vmatprep.subr.mxu0 0.0
    %1371 = vmatpush2.msra.mxu0 0.0
    %1372 = vmatprep.mubr.f32.mxu0 0.0
    %1373 = vmatmul.mubr.f32.gmra.mxu0 %v1306
    %v1374 = vpop.f32.mrf.mxu0
    %v1375 = vadd.f32 0.0, %v1374
    %v1376 = vpop.f32.mrf.mxu0
    %v1377 = vadd.f32 0.0, %v1376
    %1378 = vdwg.mxu0
    %1379 = vmatprep.subr.mxu0 %v959
    %1380 = vmatpush1.msra.mxu0 %v958
    %1381 = vmatprep.subr.mxu0 %v955
    %1382 = vmatpush1.msra.mxu0 %v954
    %1383 = vmatprep.subr.mxu0 %v951
    %1384 = vmatpush1.msra.mxu0 %v950
    %1385 = vmatprep.subr.mxu0 %v947
    %1386 = vmatpush1.msra.mxu0 %v946
    %1387 = vmatprep.subr.mxu0 %v943
    %1388 = vmatpush1.msra.mxu0 %v942
    %1389 = vmatprep.subr.mxu0 %v939
    %1390 = vmatpush1.msra.mxu0 %v938
    %1391 = vmatprep.subr.mxu0 %v935
    %1392 = vmatpush1.msra.mxu0 %v934
    %1393 = vmatprep.subr.mxu0 %v931
    %1394 = vmatpush1.msra.mxu0 %v930
    %1395 = vmatprep.subr.mxu0 %v927
    %1396 = vmatpush1.msra.mxu0 %v926
    %1397 = vmatprep.subr.mxu0 %v923
    %1398 = vmatpush1.msra.mxu0 %v922
    %1399 = vmatprep.subr.mxu0 %v919
    %1400 = vmatpush1.msra.mxu0 %v918
    %1401 = vmatprep.subr.mxu0 %v915
    %1402 = vmatpush1.msra.mxu0 %v914
    %1403 = vmatprep.subr.mxu0 %v911
    %1404 = vmatpush1.msra.mxu0 %v910
    %1405 = vmatprep.subr.mxu0 %v907
    %1406 = vmatpush1.msra.mxu0 %v906
    %1407 = vmatprep.subr.mxu0 %v903
    %1408 = vmatpush1.msra.mxu0 %v902
    %1409 = vmatprep.subr.mxu0 %v899
    %1410 = vmatpush1.msra.mxu0 %v898
    %1411 = vmatprep.subr.mxu0 0.0
    %1412 = vmatpush2.msra.mxu0 0.0
    %1413 = vmatprep.subr.mxu0 0.0
    %1414 = vmatpush2.msra.mxu0 0.0
    %1415 = vmatprep.subr.mxu0 0.0
    %1416 = vmatpush2.msra.mxu0 0.0
    %1417 = vmatprep.subr.mxu0 0.0
    %1418 = vmatpush2.msra.mxu0 0.0
    %1419 = vmatprep.subr.mxu0 0.0
    %1420 = vmatpush2.msra.mxu0 0.0
    %1421 = vmatprep.subr.mxu0 0.0
    %1422 = vmatpush2.msra.mxu0 0.0
    %1423 = vmatprep.subr.mxu0 0.0
    %1424 = vmatpush2.msra.mxu0 0.0
    %1425 = vmatprep.subr.mxu0 0.0
    %1426 = vmatpush2.msra.mxu0 0.0
    %1427 = vmatprep.subr.mxu0 0.0
    %1428 = vmatpush2.msra.mxu0 0.0
    %1429 = vmatprep.subr.mxu0 0.0
    %1430 = vmatpush2.msra.mxu0 0.0
    %1431 = vmatprep.subr.mxu0 0.0
    %1432 = vmatpush2.msra.mxu0 0.0
    %1433 = vmatprep.subr.mxu0 0.0
    %1434 = vmatpush2.msra.mxu0 0.0
    %1435 = vmatprep.subr.mxu0 0.0
    %1436 = vmatpush2.msra.mxu0 0.0
    %1437 = vmatprep.subr.mxu0 0.0
    %1438 = vmatpush2.msra.mxu0 0.0
    %1439 = vmatprep.subr.mxu0 0.0
    %1440 = vmatpush2.msra.mxu0 0.0
    %1441 = vmatprep.subr.mxu0 0.0
    %1442 = vmatpush2.msra.mxu0 0.0
    %1443 = vmatprep.mubr.f32.mxu0 0.0
    %1444 = vmatmul.mubr.f32.gmra.mxu0 %v1306
    %v1445 = vpop.f32.mrf.mxu0
    %v1446 = vadd.f32 0.0, %v1445
    %v1447 = vpop.f32.mrf.mxu0
    %v1448 = vadd.f32 0.0, %v1447
    %1449 = vdwg.mxu0
    %v1454 = vrot.slane %v1375, 4
    %v1455 = vrot.slane %v1377, 4
    %v1456 = vrot.slane %v1446, 4
    %v1457 = vrot.slane %v1448, 4
    %v1462 = vadd.f32 %v840, %v1454
    %v1463 = vadd.f32 %v841, %v1455
    %v1464 = vadd.f32 %v842, %v1456
    %v1465 = vadd.f32 %v843, %v1457
    %v1466 = vxor.u32 %v1462, 2147483648
    %v1467 = vmul.f32 %v1466, 1.442695
    %v1468 = vpow.pop %v1467
    %v1469 = vadd.f32 %v1468, 1.0
    %v1470 = vrcp.pop %v1469
    %v1471 = vmul.f32 1.0, %v1470
    %v1472 = vxor.u32 %v1463, 2147483648
    %v1473 = vmul.f32 %v1472, 1.442695
    %v1474 = vpow.pop %v1473
    %v1475 = vadd.f32 %v1474, 1.0
    %v1476 = vrcp.pop %v1475
    %v1477 = vmul.f32 1.0, %v1476
    %v1478 = vmul.f32 %v1471, %v1465
    %v1479 = vadd.f32 %v1464, %v1478
    %v1480 = vtanh.pop %v1479
    %v1481 = vsub.f32 1.0, %v1477
    %v1482 = vmul.f32 %v1481, %v1480
    %v1483 = vrot.slane %v1304, 6
    %v1485 = vmul.f32 %v1477, %v1483
    %v1486 = vadd.f32 %v1482, %v1485
    %v1488 = vrot.slane %v1486, 4
    %1490 = vmatprep.subr.mxu0 %v957
    %1491 = vmatpush1.msra.mxu0 %v956
    %1492 = vmatprep.subr.mxu0 %v953
    %1493 = vmatpush1.msra.mxu0 %v952
    %1494 = vmatprep.subr.mxu0 %v949
    %1495 = vmatpush1.msra.mxu0 %v948
    %1496 = vmatprep.subr.mxu0 %v945
    %1497 = vmatpush1.msra.mxu0 %v944
    %1498 = vmatprep.subr.mxu0 %v941
    %1499 = vmatpush1.msra.mxu0 %v940
    %1500 = vmatprep.subr.mxu0 %v937
    %1501 = vmatpush1.msra.mxu0 %v936
    %1502 = vmatprep.subr.mxu0 %v933
    %1503 = vmatpush1.msra.mxu0 %v932
    %1504 = vmatprep.subr.mxu0 %v929
    %1505 = vmatpush1.msra.mxu0 %v928
    %1506 = vmatprep.subr.mxu0 %v925
    %1507 = vmatpush1.msra.mxu0 %v924
    %1508 = vmatprep.subr.mxu0 %v921
    %1509 = vmatpush1.msra.mxu0 %v920
    %1510 = vmatprep.subr.mxu0 %v917
    %1511 = vmatpush1.msra.mxu0 %v916
    %1512 = vmatprep.subr.mxu0 %v913
    %1513 = vmatpush1.msra.mxu0 %v912
    %1514 = vmatprep.subr.mxu0 %v909
    %1515 = vmatpush1.msra.mxu0 %v908
    %1516 = vmatprep.subr.mxu0 %v905
    %1517 = vmatpush1.msra.mxu0 %v904
    %1518 = vmatprep.subr.mxu0 %v901
    %1519 = vmatpush1.msra.mxu0 %v900
    %1520 = vmatprep.subr.mxu0 %v897
    %1521 = vmatpush1.msra.mxu0 %v896
    %1522 = vmatprep.subr.mxu0 0.0
    %1523 = vmatpush2.msra.mxu0 0.0
    %1524 = vmatprep.subr.mxu0 0.0
    %1525 = vmatpush2.msra.mxu0 0.0
    %1526 = vmatprep.subr.mxu0 0.0
    %1527 = vmatpush2.msra.mxu0 0.0
    %1528 = vmatprep.subr.mxu0 0.0
    %1529 = vmatpush2.msra.mxu0 0.0
    %1530 = vmatprep.subr.mxu0 0.0
    %1531 = vmatpush2.msra.mxu0 0.0
    %1532 = vmatprep.subr.mxu0 0.0
    %1533 = vmatpush2.msra.mxu0 0.0
    %1534 = vmatprep.subr.mxu0 0.0
    %1535 = vmatpush2.msra.mxu0 0.0
    %1536 = vmatprep.subr.mxu0 0.0
    %1537 = vmatpush2.msra.mxu0 0.0
    %1538 = vmatprep.subr.mxu0 0.0
    %1539 = vmatpush2.msra.mxu0 0.0
    %1540 = vmatprep.subr.mxu0 0.0
    %1541 = vmatpush2.msra.mxu0 0.0
    %1542 = vmatprep.subr.mxu0 0.0
    %1543 = vmatpush2.msra.mxu0 0.0
    %1544 = vmatprep.subr.mxu0 0.0
    %1545 = vmatpush2.msra.mxu0 0.0
    %1546 = vmatprep.subr.mxu0 0.0
    %1547 = vmatpush2.msra.mxu0 0.0
    %1548 = vmatprep.subr.mxu0 0.0
    %1549 = vmatpush2.msra.mxu0 0.0
    %1550 = vmatprep.subr.mxu0 0.0
    %1551 = vmatpush2.msra.mxu0 0.0
    %1552 = vmatprep.subr.mxu0 0.0
    %1553 = vmatpush2.msra.mxu0 0.0
    %1554 = vmatprep.mubr.f32.mxu0 0.0
    %1555 = vmatmul.mubr.f32.gmra.mxu0 %v1488
    %v1556 = vpop.f32.mrf.mxu0
    %v1557 = vadd.f32 0.0, %v1556
    %v1558 = vpop.f32.mrf.mxu0
    %v1559 = vadd.f32 0.0, %v1558
    %1560 = vdwg.mxu0
    %1561 = vmatprep.subr.mxu0 %v959
    %1562 = vmatpush1.msra.mxu0 %v958
    %1563 = vmatprep.subr.mxu0 %v955
    %1564 = vmatpush1.msra.mxu0 %v954
    %1565 = vmatprep.subr.mxu0 %v951
    %1566 = vmatpush1.msra.mxu0 %v950
    %1567 = vmatprep.subr.mxu0 %v947
    %1568 = vmatpush1.msra.mxu0 %v946
    %1569 = vmatprep.subr.mxu0 %v943
    %1570 = vmatpush1.msra.mxu0 %v942
    %1571 = vmatprep.subr.mxu0 %v939
    %1572 = vmatpush1.msra.mxu0 %v938
    %1573 = vmatprep.subr.mxu0 %v935
    %1574 = vmatpush1.msra.mxu0 %v934
    %1575 = vmatprep.subr.mxu0 %v931
    %1576 = vmatpush1.msra.mxu0 %v930
    %1577 = vmatprep.subr.mxu0 %v927
    %1578 = vmatpush1.msra.mxu0 %v926
    %1579 = vmatprep.subr.mxu0 %v923
    %1580 = vmatpush1.msra.mxu0 %v922
    %1581 = vmatprep.subr.mxu0 %v919
    %1582 = vmatpush1.msra.mxu0 %v918
    %1583 = vmatprep.subr.mxu0 %v915
    %1584 = vmatpush1.msra.mxu0 %v914
    %1585 = vmatprep.subr.mxu0 %v911
    %1586 = vmatpush1.msra.mxu0 %v910
    %1587 = vmatprep.subr.mxu0 %v907
    %1588 = vmatpush1.msra.mxu0 %v906
    %1589 = vmatprep.subr.mxu0 %v903
    %1590 = vmatpush1.msra.mxu0 %v902
    %1591 = vmatprep.subr.mxu0 %v899
    %1592 = vmatpush1.msra.mxu0 %v898
    %1593 = vmatprep.subr.mxu0 0.0
    %1594 = vmatpush2.msra.mxu0 0.0
    %1595 = vmatprep.subr.mxu0 0.0
    %1596 = vmatpush2.msra.mxu0 0.0
    %1597 = vmatprep.subr.mxu0 0.0
    %1598 = vmatpush2.msra.mxu0 0.0
    %1599 = vmatprep.subr.mxu0 0.0
    %1600 = vmatpush2.msra.mxu0 0.0
    %1601 = vmatprep.subr.mxu0 0.0
    %1602 = vmatpush2.msra.mxu0 0.0
    %1603 = vmatprep.subr.mxu0 0.0
    %1604 = vmatpush2.msra.mxu0 0.0
    %1605 = vmatprep.subr.mxu0 0.0
    %1606 = vmatpush2.msra.mxu0 0.0
    %1607 = vmatprep.subr.mxu0 0.0
    %1608 = vmatpush2.msra.mxu0 0.0
    %1609 = vmatprep.subr.mxu0 0.0
    %1610 = vmatpush2.msra.mxu0 0.0
    %1611 = vmatprep.subr.mxu0 0.0
    %1612 = vmatpush2.msra.mxu0 0.0
    %1613 = vmatprep.subr.mxu0 0.0
    %1614 = vmatpush2.msra.mxu0 0.0
    %1615 = vmatprep.subr.mxu0 0.0
    %1616 = vmatpush2.msra.mxu0 0.0
    %1617 = vmatprep.subr.mxu0 0.0
    %1618 = vmatpush2.msra.mxu0 0.0
    %1619 = vmatprep.subr.mxu0 0.0
    %1620 = vmatpush2.msra.mxu0 0.0
    %1621 = vmatprep.subr.mxu0 0.0
    %1622 = vmatpush2.msra.mxu0 0.0
    %1623 = vmatprep.subr.mxu0 0.0
    %1624 = vmatpush2.msra.mxu0 0.0
    %1625 = vmatprep.mubr.f32.mxu0 0.0
    %1626 = vmatmul.mubr.f32.gmra.mxu0 %v1488
    %v1627 = vpop.f32.mrf.mxu0
    %v1628 = vadd.f32 0.0, %v1627
    %v1629 = vpop.f32.mrf.mxu0
    %v1630 = vadd.f32 0.0, %v1629
    %1631 = vdwg.mxu0
    %v1636 = vrot.slane %v1557, 2
    %v1637 = vrot.slane %v1559, 2
    %v1638 = vrot.slane %v1628, 2
    %v1639 = vrot.slane %v1630, 2
    %v1644 = vadd.f32 %v840, %v1636
    %v1645 = vadd.f32 %v841, %v1637
    %v1646 = vadd.f32 %v842, %v1638
    %v1647 = vadd.f32 %v843, %v1639
    %v1648 = vxor.u32 %v1644, 2147483648
    %v1649 = vmul.f32 %v1648, 1.442695
    %v1650 = vpow.pop %v1649
    %v1651 = vadd.f32 %v1650, 1.0
    %v1652 = vrcp.pop %v1651
    %v1653 = vmul.f32 1.0, %v1652
    %v1654 = vxor.u32 %v1645, 2147483648
    %v1655 = vmul.f32 %v1654, 1.442695
    %v1656 = vpow.pop %v1655
    %v1657 = vadd.f32 %v1656, 1.0
    %v1658 = vrcp.pop %v1657
    %v1659 = vmul.f32 1.0, %v1658
    %v1660 = vmul.f32 %v1653, %v1647
    %v1661 = vadd.f32 %v1646, %v1660
    %v1662 = vtanh.pop %v1661
    %v1663 = vsub.f32 1.0, %v1659
    %v1664 = vmul.f32 %v1663, %v1662
    %v1665 = vrot.slane %v1486, 6
    %v1667 = vmul.f32 %v1659, %v1665
    %v1668 = vadd.f32 %v1664, %v1667
    %v1670 = vrot.slane %v1668, 6
    %1672 = vmatprep.subr.mxu0 %v957
    %1673 = vmatpush1.msra.mxu0 %v956
    %1674 = vmatprep.subr.mxu0 %v953
    %1675 = vmatpush1.msra.mxu0 %v952
    %1676 = vmatprep.subr.mxu0 %v949
    %1677 = vmatpush1.msra.mxu0 %v948
    %1678 = vmatprep.subr.mxu0 %v945
    %1679 = vmatpush1.msra.mxu0 %v944
    %1680 = vmatprep.subr.mxu0 %v941
    %1681 = vmatpush1.msra.mxu0 %v940
    %1682 = vmatprep.subr.mxu0 %v937
    %1683 = vmatpush1.msra.mxu0 %v936
    %1684 = vmatprep.subr.mxu0 %v933
    %1685 = vmatpush1.msra.mxu0 %v932
    %1686 = vmatprep.subr.mxu0 %v929
    %1687 = vmatpush1.msra.mxu0 %v928
    %1688 = vmatprep.subr.mxu0 %v925
    %1689 = vmatpush1.msra.mxu0 %v924
    %1690 = vmatprep.subr.mxu0 %v921
    %1691 = vmatpush1.msra.mxu0 %v920
    %1692 = vmatprep.subr.mxu0 %v917
    %1693 = vmatpush1.msra.mxu0 %v916
    %1694 = vmatprep.subr.mxu0 %v913
    %1695 = vmatpush1.msra.mxu0 %v912
    %1696 = vmatprep.subr.mxu0 %v909
    %1697 = vmatpush1.msra.mxu0 %v908
    %1698 = vmatprep.subr.mxu0 %v905
    %1699 = vmatpush1.msra.mxu0 %v904
    %1700 = vmatprep.subr.mxu0 %v901
    %1701 = vmatpush1.msra.mxu0 %v900
    %1702 = vmatprep.subr.mxu0 %v897
    %1703 = vmatpush1.msra.mxu0 %v896
    %1704 = vmatprep.subr.mxu0 0.0
    %1705 = vmatpush2.msra.mxu0 0.0
    %1706 = vmatprep.subr.mxu0 0.0
    %1707 = vmatpush2.msra.mxu0 0.0
    %1708 = vmatprep.subr.mxu0 0.0
    %1709 = vmatpush2.msra.mxu0 0.0
    %1710 = vmatprep.subr.mxu0 0.0
    %1711 = vmatpush2.msra.mxu0 0.0
    %1712 = vmatprep.subr.mxu0 0.0
    %1713 = vmatpush2.msra.mxu0 0.0
    %1714 = vmatprep.subr.mxu0 0.0
    %1715 = vmatpush2.msra.mxu0 0.0
    %1716 = vmatprep.subr.mxu0 0.0
    %1717 = vmatpush2.msra.mxu0 0.0
    %1718 = vmatprep.subr.mxu0 0.0
    %1719 = vmatpush2.msra.mxu0 0.0
    %1720 = vmatprep.subr.mxu0 0.0
    %1721 = vmatpush2.msra.mxu0 0.0
    %1722 = vmatprep.subr.mxu0 0.0
    %1723 = vmatpush2.msra.mxu0 0.0
    %1724 = vmatprep.subr.mxu0 0.0
    %1725 = vmatpush2.msra.mxu0 0.0
    %1726 = vmatprep.subr.mxu0 0.0
    %1727 = vmatpush2.msra.mxu0 0.0
    %1728 = vmatprep.subr.mxu0 0.0
    %1729 = vmatpush2.msra.mxu0 0.0
    %1730 = vmatprep.subr.mxu0 0.0
    %1731 = vmatpush2.msra.mxu0 0.0
    %1732 = vmatprep.subr.mxu0 0.0
    %1733 = vmatpush2.msra.mxu0 0.0
    %1734 = vmatprep.subr.mxu0 0.0
    %1735 = vmatpush2.msra.mxu0 0.0
    %1736 = vmatprep.mubr.f32.mxu0 0.0
    %1737 = vmatmul.mubr.f32.gmra.mxu0 %v1670
    %v1738 = vpop.f32.mrf.mxu0
    %v1739 = vadd.f32 0.0, %v1738
    %v1740 = vpop.f32.mrf.mxu0
    %v1741 = vadd.f32 0.0, %v1740
    %1742 = vdwg.mxu0
    %1743 = vmatprep.subr.mxu0 %v959
    %1744 = vmatpush1.msra.mxu0 %v958
    %1745 = vmatprep.subr.mxu0 %v955
    %1746 = vmatpush1.msra.mxu0 %v954
    %1747 = vmatprep.subr.mxu0 %v951
    %1748 = vmatpush1.msra.mxu0 %v950
    %1749 = vmatprep.subr.mxu0 %v947
    %1750 = vmatpush1.msra.mxu0 %v946
    %1751 = vmatprep.subr.mxu0 %v943
    %1752 = vmatpush1.msra.mxu0 %v942
    %1753 = vmatprep.subr.mxu0 %v939
    %1754 = vmatpush1.msra.mxu0 %v938
    %1755 = vmatprep.subr.mxu0 %v935
    %1756 = vmatpush1.msra.mxu0 %v934
    %1757 = vmatprep.subr.mxu0 %v931
    %1758 = vmatpush1.msra.mxu0 %v930
    %1759 = vmatprep.subr.mxu0 %v927
    %1760 = vmatpush1.msra.mxu0 %v926
    %1761 = vmatprep.subr.mxu0 %v923
    %1762 = vmatpush1.msra.mxu0 %v922
    %1763 = vmatprep.subr.mxu0 %v919
    %1764 = vmatpush1.msra.mxu0 %v918
    %1765 = vmatprep.subr.mxu0 %v915
    %1766 = vmatpush1.msra.mxu0 %v914
    %1767 = vmatprep.subr.mxu0 %v911
    %1768 = vmatpush1.msra.mxu0 %v910
    %1769 = vmatprep.subr.mxu0 %v907
    %1770 = vmatpush1.msra.mxu0 %v906
    %1771 = vmatprep.subr.mxu0 %v903
    %1772 = vmatpush1.msra.mxu0 %v902
    %1773 = vmatprep.subr.mxu0 %v899
    %1774 = vmatpush1.msra.mxu0 %v898
    %1775 = vmatprep.subr.mxu0 0.0
    %1776 = vmatpush2.msra.mxu0 0.0
    %1777 = vmatprep.subr.mxu0 0.0
    %1778 = vmatpush2.msra.mxu0 0.0
    %1779 = vmatprep.subr.mxu0 0.0
    %1780 = vmatpush2.msra.mxu0 0.0
    %1781 = vmatprep.subr.mxu0 0.0
    %1782 = vmatpush2.msra.mxu0 0.0
    %1783 = vmatprep.subr.mxu0 0.0
    %1784 = vmatpush2.msra.mxu0 0.0
    %1785 = vmatprep.subr.mxu0 0.0
    %1786 = vmatpush2.msra.mxu0 0.0
    %1787 = vmatprep.subr.mxu0 0.0
    %1788 = vmatpush2.msra.mxu0 0.0
    %1789 = vmatprep.subr.mxu0 0.0
    %1790 = vmatpush2.msra.mxu0 0.0
    %1791 = vmatprep.subr.mxu0 0.0
    %1792 = vmatpush2.msra.mxu0 0.0
    %1793 = vmatprep.subr.mxu0 0.0
    %1794 = vmatpush2.msra.mxu0 0.0
    %1795 = vmatprep.subr.mxu0 0.0
    %1796 = vmatpush2.msra.mxu0 0.0
    %1797 = vmatprep.subr.mxu0 0.0
    %1798 = vmatpush2.msra.mxu0 0.0
    %1799 = vmatprep.subr.mxu0 0.0
    %1800 = vmatpush2.msra.mxu0 0.0
    %1801 = vmatprep.subr.mxu0 0.0
    %1802 = vmatpush2.msra.mxu0 0.0
    %1803 = vmatprep.subr.mxu0 0.0
    %1804 = vmatpush2.msra.mxu0 0.0
    %1805 = vmatprep.subr.mxu0 0.0
    %1806 = vmatpush2.msra.mxu0 0.0
    %1807 = vmatprep.mubr.f32.mxu0 0.0
    %1808 = vmatmul.mubr.f32.gmra.mxu0 %v1670
    %v1809 = vpop.f32.mrf.mxu0
    %v1810 = vadd.f32 0.0, %v1809
    %v1811 = vpop.f32.mrf.mxu0
    %v1812 = vadd.f32 0.0, %v1811
    %1813 = vdwg.mxu0
    %v1814 = vadd.f32 %v844, %v1739
    %v1815 = vadd.f32 %v845, %v1741
    %v1816 = vadd.f32 %v846, %v1810
    %v1817 = vadd.f32 %v847, %v1812
    %v1818 = vxor.u32 %v1814, 2147483648
    %v1819 = vmul.f32 %v1818, 1.442695
    %v1820 = vpow.pop %v1819
    %v1821 = vadd.f32 %v1820, 1.0
    %v1822 = vrcp.pop %v1821
    %v1823 = vmul.f32 1.0, %v1822
    %v1824 = vxor.u32 %v1815, 2147483648
    %v1825 = vmul.f32 %v1824, 1.442695
    %v1826 = vpow.pop %v1825
    %v1827 = vadd.f32 %v1826, 1.0
    %v1828 = vrcp.pop %v1827
    %v1829 = vmul.f32 1.0, %v1828
    %v1830 = vmul.f32 %v1823, %v1817
    %v1831 = vadd.f32 %v1816, %v1830
    %v1832 = vtanh.pop %v1831
    %v1833 = vsub.f32 1.0, %v1829
    %v1834 = vmul.f32 %v1833, %v1832
    %v1835 = vmul.f32 %v1829, %v1670
    %v1836 = vadd.f32 %v1834, %v1835
    %1837 = vmatprep.subr.mxu0 %v957
    %1838 = vmatpush1.msra.mxu0 %v956
    %1839 = vmatprep.subr.mxu0 %v953
    %1840 = vmatpush1.msra.mxu0 %v952
    %1841 = vmatprep.subr.mxu0 %v949
    %1842 = vmatpush1.msra.mxu0 %v948
    %1843 = vmatprep.subr.mxu0 %v945
    %1844 = vmatpush1.msra.mxu0 %v944
    %1845 = vmatprep.subr.mxu0 %v941
    %1846 = vmatpush1.msra.mxu0 %v940
    %1847 = vmatprep.subr.mxu0 %v937
    %1848 = vmatpush1.msra.mxu0 %v936
    %1849 = vmatprep.subr.mxu0 %v933
    %1850 = vmatpush1.msra.mxu0 %v932
    %1851 = vmatprep.subr.mxu0 %v929
    %1852 = vmatpush1.msra.mxu0 %v928
    %1853 = vmatprep.subr.mxu0 %v925
    %1854 = vmatpush1.msra.mxu0 %v924
    %1855 = vmatprep.subr.mxu0 %v921
    %1856 = vmatpush1.msra.mxu0 %v920
    %1857 = vmatprep.subr.mxu0 %v917
    %1858 = vmatpush1.msra.mxu0 %v916
    %1859 = vmatprep.subr.mxu0 %v913
    %1860 = vmatpush1.msra.mxu0 %v912
    %1861 = vmatprep.subr.mxu0 %v909
    %1862 = vmatpush1.msra.mxu0 %v908
    %1863 = vmatprep.subr.mxu0 %v905
    %1864 = vmatpush1.msra.mxu0 %v904
    %1865 = vmatprep.subr.mxu0 %v901
    %1866 = vmatpush1.msra.mxu0 %v900
    %1867 = vmatprep.subr.mxu0 %v897
    %1868 = vmatpush1.msra.mxu0 %v896
    %1869 = vmatprep.subr.mxu0 0.0
    %1870 = vmatpush2.msra.mxu0 0.0
    %1871 = vmatprep.subr.mxu0 0.0
    %1872 = vmatpush2.msra.mxu0 0.0
    %1873 = vmatprep.subr.mxu0 0.0
    %1874 = vmatpush2.msra.mxu0 0.0
    %1875 = vmatprep.subr.mxu0 0.0
    %1876 = vmatpush2.msra.mxu0 0.0
    %1877 = vmatprep.subr.mxu0 0.0
    %1878 = vmatpush2.msra.mxu0 0.0
    %1879 = vmatprep.subr.mxu0 0.0
    %1880 = vmatpush2.msra.mxu0 0.0
    %1881 = vmatprep.subr.mxu0 0.0
    %1882 = vmatpush2.msra.mxu0 0.0
    %1883 = vmatprep.subr.mxu0 0.0
    %1884 = vmatpush2.msra.mxu0 0.0
    %1885 = vmatprep.subr.mxu0 0.0
    %1886 = vmatpush2.msra.mxu0 0.0
    %1887 = vmatprep.subr.mxu0 0.0
    %1888 = vmatpush2.msra.mxu0 0.0
    %1889 = vmatprep.subr.mxu0 0.0
    %1890 = vmatpush2.msra.mxu0 0.0
    %1891 = vmatprep.subr.mxu0 0.0
    %1892 = vmatpush2.msra.mxu0 0.0
    %1893 = vmatprep.subr.mxu0 0.0
    %1894 = vmatpush2.msra.mxu0 0.0
    %1895 = vmatprep.subr.mxu0 0.0
    %1896 = vmatpush2.msra.mxu0 0.0
    %1897 = vmatprep.subr.mxu0 0.0
    %1898 = vmatpush2.msra.mxu0 0.0
    %1899 = vmatprep.subr.mxu0 0.0
    %1900 = vmatpush2.msra.mxu0 0.0
    %1901 = vmatprep.mubr.f32.mxu0 0.0
    %1902 = vmatmul.mubr.f32.gmra.mxu0 %v1836
    %v1903 = vpop.f32.mrf.mxu0
    %v1904 = vadd.f32 0.0, %v1903
    %v1905 = vpop.f32.mrf.mxu0
    %v1906 = vadd.f32 0.0, %v1905
    %1907 = vdwg.mxu0
    %1908 = vmatprep.subr.mxu0 %v959
    %1909 = vmatpush1.msra.mxu0 %v958
    %1910 = vmatprep.subr.mxu0 %v955
    %1911 = vmatpush1.msra.mxu0 %v954
    %1912 = vmatprep.subr.mxu0 %v951
    %1913 = vmatpush1.msra.mxu0 %v950
    %1914 = vmatprep.subr.mxu0 %v947
    %1915 = vmatpush1.msra.mxu0 %v946
    %1916 = vmatprep.subr.mxu0 %v943
    %1917 = vmatpush1.msra.mxu0 %v942
    %1918 = vmatprep.subr.mxu0 %v939
    %1919 = vmatpush1.msra.mxu0 %v938
    %1920 = vmatprep.subr.mxu0 %v935
    %1921 = vmatpush1.msra.mxu0 %v934
    %1922 = vmatprep.subr.mxu0 %v931
    %1923 = vmatpush1.msra.mxu0 %v930
    %1924 = vmatprep.subr.mxu0 %v927
    %1925 = vmatpush1.msra.mxu0 %v926
    %1926 = vmatprep.subr.mxu0 %v923
    %1927 = vmatpush1.msra.mxu0 %v922
    %1928 = vmatprep.subr.mxu0 %v919
    %1929 = vmatpush1.msra.mxu0 %v918
    %1930 = vmatprep.subr.mxu0 %v915
    %1931 = vmatpush1.msra.mxu0 %v914
    %1932 = vmatprep.subr.mxu0 %v911
    %1933 = vmatpush1.msra.mxu0 %v910
    %1934 = vmatprep.subr.mxu0 %v907
    %1935 = vmatpush1.msra.mxu0 %v906
    %1936 = vmatprep.subr.mxu0 %v903
    %1937 = vmatpush1.msra.mxu0 %v902
    %1938 = vmatprep.subr.mxu0 %v899
    %1939 = vmatpush1.msra.mxu0 %v898
    %1940 = vmatprep.subr.mxu0 0.0
    %1941 = vmatpush2.msra.mxu0 0.0
    %1942 = vmatprep.subr.mxu0 0.0
    %1943 = vmatpush2.msra.mxu0 0.0
    %1944 = vmatprep.subr.mxu0 0.0
    %1945 = vmatpush2.msra.mxu0 0.0
    %1946 = vmatprep.subr.mxu0 0.0
    %1947 = vmatpush2.msra.mxu0 0.0
    %1948 = vmatprep.subr.mxu0 0.0
    %1949 = vmatpush2.msra.mxu0 0.0
    %1950 = vmatprep.subr.mxu0 0.0
    %1951 = vmatpush2.msra.mxu0 0.0
    %1952 = vmatprep.subr.mxu0 0.0
    %1953 = vmatpush2.msra.mxu0 0.0
    %1954 = vmatprep.subr.mxu0 0.0
    %1955 = vmatpush2.msra.mxu0 0.0
    %1956 = vmatprep.subr.mxu0 0.0
    %1957 = vmatpush2.msra.mxu0 0.0
    %1958 = vmatprep.subr.mxu0 0.0
    %1959 = vmatpush2.msra.mxu0 0.0
    %1960 = vmatprep.subr.mxu0 0.0
    %1961 = vmatpush2.msra.mxu0 0.0
    %1962 = vmatprep.subr.mxu0 0.0
    %1963 = vmatpush2.msra.mxu0 0.0
    %1964 = vmatprep.subr.mxu0 0.0
    %1965 = vmatpush2.msra.mxu0 0.0
    %1966 = vmatprep.subr.mxu0 0.0
    %1967 = vmatpush2.msra.mxu0 0.0
    %1968 = vmatprep.subr.mxu0 0.0
    %1969 = vmatpush2.msra.mxu0 0.0
    %1970 = vmatprep.subr.mxu0 0.0
    %1971 = vmatpush2.msra.mxu0 0.0
    %1972 = vmatprep.mubr.f32.mxu0 0.0
    %1973 = vmatmul.mubr.f32.gmra.mxu0 %v1836
    %v1974 = vpop.f32.mrf.mxu0
    %v1975 = vadd.f32 0.0, %v1974
    %v1976 = vpop.f32.mrf.mxu0
    %v1977 = vadd.f32 0.0, %v1976
    %1978 = vdwg.mxu0
    %v1983 = vrot.slane %v1904, 6
    %v1984 = vrot.slane %v1906, 6
    %v1985 = vrot.slane %v1975, 6
    %v1986 = vrot.slane %v1977, 6
    %v1991 = vadd.f32 %v844, %v1983
    %v1992 = vadd.f32 %v845, %v1984
    %v1993 = vadd.f32 %v846, %v1985
    %v1994 = vadd.f32 %v847, %v1986
    %v1995 = vxor.u32 %v1991, 2147483648
    %v1996 = vmul.f32 %v1995, 1.442695
    %v1997 = vpow.pop %v1996
    %v1998 = vadd.f32 %v1997, 1.0
    %v1999 = vrcp.pop %v1998
    %v2000 = vmul.f32 1.0, %v1999
    %v2001 = vxor.u32 %v1992, 2147483648
    %v2002 = vmul.f32 %v2001, 1.442695
    %v2003 = vpow.pop %v2002
    %v2004 = vadd.f32 %v2003, 1.0
    %v2005 = vrcp.pop %v2004
    %v2006 = vmul.f32 1.0, %v2005
    %v2007 = vmul.f32 %v2000, %v1994
    %v2008 = vadd.f32 %v1993, %v2007
    %v2009 = vtanh.pop %v2008
    %v2010 = vsub.f32 1.0, %v2006
    %v2011 = vmul.f32 %v2010, %v2009
    %v2013 = vrot.slane %v1836, 6
    %v2015 = vmul.f32 %v2006, %v2013
    %v2016 = vadd.f32 %v2011, %v2015
    %v2018 = vrot.slane %v2016, 2
    %2020 = vmatprep.subr.mxu0 %v957
    %2021 = vmatpush1.msra.mxu0 %v956
    %2022 = vmatprep.subr.mxu0 %v953
    %2023 = vmatpush1.msra.mxu0 %v952
    %2024 = vmatprep.subr.mxu0 %v949
    %2025 = vmatpush1.msra.mxu0 %v948
    %2026 = vmatprep.subr.mxu0 %v945
    %2027 = vmatpush1.msra.mxu0 %v944
    %2028 = vmatprep.subr.mxu0 %v941
    %2029 = vmatpush1.msra.mxu0 %v940
    %2030 = vmatprep.subr.mxu0 %v937
    %2031 = vmatpush1.msra.mxu0 %v936
    %2032 = vmatprep.subr.mxu0 %v933
    %2033 = vmatpush1.msra.mxu0 %v932
    %2034 = vmatprep.subr.mxu0 %v929
    %2035 = vmatpush1.msra.mxu0 %v928
    %2036 = vmatprep.subr.mxu0 %v925
    %2037 = vmatpush1.msra.mxu0 %v924
    %2038 = vmatprep.subr.mxu0 %v921
    %2039 = vmatpush1.msra.mxu0 %v920
    %2040 = vmatprep.subr.mxu0 %v917
    %2041 = vmatpush1.msra.mxu0 %v916
    %2042 = vmatprep.subr.mxu0 %v913
    %2043 = vmatpush1.msra.mxu0 %v912
    %2044 = vmatprep.subr.mxu0 %v909
    %2045 = vmatpush1.msra.mxu0 %v908
    %2046 = vmatprep.subr.mxu0 %v905
    %2047 = vmatpush1.msra.mxu0 %v904
    %2048 = vmatprep.subr.mxu0 %v901
    %2049 = vmatpush1.msra.mxu0 %v900
    %2050 = vmatprep.subr.mxu0 %v897
    %2051 = vmatpush1.msra.mxu0 %v896
    %2052 = vmatprep.subr.mxu0 0.0
    %2053 = vmatpush2.msra.mxu0 0.0
    %2054 = vmatprep.subr.mxu0 0.0
    %2055 = vmatpush2.msra.mxu0 0.0
    %2056 = vmatprep.subr.mxu0 0.0
    %2057 = vmatpush2.msra.mxu0 0.0
    %2058 = vmatprep.subr.mxu0 0.0
    %2059 = vmatpush2.msra.mxu0 0.0
    %2060 = vmatprep.subr.mxu0 0.0
    %2061 = vmatpush2.msra.mxu0 0.0
    %2062 = vmatprep.subr.mxu0 0.0
    %2063 = vmatpush2.msra.mxu0 0.0
    %2064 = vmatprep.subr.mxu0 0.0
    %2065 = vmatpush2.msra.mxu0 0.0
    %2066 = vmatprep.subr.mxu0 0.0
    %2067 = vmatpush2.msra.mxu0 0.0
    %2068 = vmatprep.subr.mxu0 0.0
    %2069 = vmatpush2.msra.mxu0 0.0
    %2070 = vmatprep.subr.mxu0 0.0
    %2071 = vmatpush2.msra.mxu0 0.0
    %2072 = vmatprep.subr.mxu0 0.0
    %2073 = vmatpush2.msra.mxu0 0.0
    %2074 = vmatprep.subr.mxu0 0.0
    %2075 = vmatpush2.msra.mxu0 0.0
    %2076 = vmatprep.subr.mxu0 0.0
    %2077 = vmatpush2.msra.mxu0 0.0
    %2078 = vmatprep.subr.mxu0 0.0
    %2079 = vmatpush2.msra.mxu0 0.0
    %2080 = vmatprep.subr.mxu0 0.0
    %2081 = vmatpush2.msra.mxu0 0.0
    %2082 = vmatprep.subr.mxu0 0.0
    %2083 = vmatpush2.msra.mxu0 0.0
    %2084 = vmatprep.mubr.f32.mxu0 0.0
    %2085 = vmatmul.mubr.f32.gmra.mxu0 %v2018
    %v2086 = vpop.f32.mrf.mxu0
    %v2087 = vadd.f32 0.0, %v2086
    %v2088 = vpop.f32.mrf.mxu0
    %v2089 = vadd.f32 0.0, %v2088
    %2090 = vdwg.mxu0
    %2091 = vmatprep.subr.mxu0 %v959
    %2092 = vmatpush1.msra.mxu0 %v958
    %2093 = vmatprep.subr.mxu0 %v955
    %2094 = vmatpush1.msra.mxu0 %v954
    %2095 = vmatprep.subr.mxu0 %v951
    %2096 = vmatpush1.msra.mxu0 %v950
    %2097 = vmatprep.subr.mxu0 %v947
    %2098 = vmatpush1.msra.mxu0 %v946
    %2099 = vmatprep.subr.mxu0 %v943
    %2100 = vmatpush1.msra.mxu0 %v942
    %2101 = vmatprep.subr.mxu0 %v939
    %2102 = vmatpush1.msra.mxu0 %v938
    %2103 = vmatprep.subr.mxu0 %v935
    %2104 = vmatpush1.msra.mxu0 %v934
    %2105 = vmatprep.subr.mxu0 %v931
    %2106 = vmatpush1.msra.mxu0 %v930
    %2107 = vmatprep.subr.mxu0 %v927
    %2108 = vmatpush1.msra.mxu0 %v926
    %2109 = vmatprep.subr.mxu0 %v923
    %2110 = vmatpush1.msra.mxu0 %v922
    %2111 = vmatprep.subr.mxu0 %v919
    %2112 = vmatpush1.msra.mxu0 %v918
    %2113 = vmatprep.subr.mxu0 %v915
    %2114 = vmatpush1.msra.mxu0 %v914
    %2115 = vmatprep.subr.mxu0 %v911
    %2116 = vmatpush1.msra.mxu0 %v910
    %2117 = vmatprep.subr.mxu0 %v907
    %2118 = vmatpush1.msra.mxu0 %v906
    %2119 = vmatprep.subr.mxu0 %v903
    %2120 = vmatpush1.msra.mxu0 %v902
    %2121 = vmatprep.subr.mxu0 %v899
    %2122 = vmatpush1.msra.mxu0 %v898
    %2123 = vmatprep.subr.mxu0 0.0
    %2124 = vmatpush2.msra.mxu0 0.0
    %2125 = vmatprep.subr.mxu0 0.0
    %2126 = vmatpush2.msra.mxu0 0.0
    %2127 = vmatprep.subr.mxu0 0.0
    %2128 = vmatpush2.msra.mxu0 0.0
    %2129 = vmatprep.subr.mxu0 0.0
    %2130 = vmatpush2.msra.mxu0 0.0
    %2131 = vmatprep.subr.mxu0 0.0
    %2132 = vmatpush2.msra.mxu0 0.0
    %2133 = vmatprep.subr.mxu0 0.0
    %2134 = vmatpush2.msra.mxu0 0.0
    %2135 = vmatprep.subr.mxu0 0.0
    %2136 = vmatpush2.msra.mxu0 0.0
    %2137 = vmatprep.subr.mxu0 0.0
    %2138 = vmatpush2.msra.mxu0 0.0
    %2139 = vmatprep.subr.mxu0 0.0
    %2140 = vmatpush2.msra.mxu0 0.0
    %2141 = vmatprep.subr.mxu0 0.0
    %2142 = vmatpush2.msra.mxu0 0.0
    %2143 = vmatprep.subr.mxu0 0.0
    %2144 = vmatpush2.msra.mxu0 0.0
    %2145 = vmatprep.subr.mxu0 0.0
    %2146 = vmatpush2.msra.mxu0 0.0
    %2147 = vmatprep.subr.mxu0 0.0
    %2148 = vmatpush2.msra.mxu0 0.0
    %2149 = vmatprep.subr.mxu0 0.0
    %2150 = vmatpush2.msra.mxu0 0.0
    %2151 = vmatprep.subr.mxu0 0.0
    %2152 = vmatpush2.msra.mxu0 0.0
    %2153 = vmatprep.subr.mxu0 0.0
    %2154 = vmatpush2.msra.mxu0 0.0
    %2155 = vmatprep.mubr.f32.mxu0 0.0
    %2156 = vmatmul.mubr.f32.gmra.mxu0 %v2018
    %v2157 = vpop.f32.mrf.mxu0
    %v2158 = vadd.f32 0.0, %v2157
    %v2159 = vpop.f32.mrf.mxu0
    %v2160 = vadd.f32 0.0, %v2159
    %2161 = vdwg.mxu0
    %v2166 = vrot.slane %v2087, 4
    %v2167 = vrot.slane %v2089, 4
    %v2168 = vrot.slane %v2158, 4
    %v2169 = vrot.slane %v2160, 4
    %v2174 = vadd.f32 %v860, %v2166
    %v2175 = vadd.f32 %v861, %v2167
    %v2176 = vadd.f32 %v862, %v2168
    %v2177 = vadd.f32 %v863, %v2169
    %v2178 = vxor.u32 %v2174, 2147483648
    %v2179 = vmul.f32 %v2178, 1.442695
    %v2180 = vpow.pop %v2179
    %v2181 = vadd.f32 %v2180, 1.0
    %v2182 = vrcp.pop %v2181
    %v2183 = vmul.f32 1.0, %v2182
    %v2184 = vxor.u32 %v2175, 2147483648
    %v2185 = vmul.f32 %v2184, 1.442695
    %v2186 = vpow.pop %v2185
    %v2187 = vadd.f32 %v2186, 1.0
    %v2188 = vrcp.pop %v2187
    %v2189 = vmul.f32 1.0, %v2188
    %v2190 = vmul.f32 %v2183, %v2177
    %v2191 = vadd.f32 %v2176, %v2190
    %v2192 = vtanh.pop %v2191
    %v2193 = vsub.f32 1.0, %v2189
    %v2194 = vmul.f32 %v2193, %v2192
    %v2195 = vrot.slane %v2016, 6
    %v2197 = vmul.f32 %v2189, %v2195
    %v2198 = vadd.f32 %v2194, %v2197
    %v2200 = vrot.slane %v2198, 4
    %2202 = vmatprep.subr.mxu0 %v957
    %2203 = vmatpush1.msra.mxu0 %v956
    %2204 = vmatprep.subr.mxu0 %v953
    %2205 = vmatpush1.msra.mxu0 %v952
    %2206 = vmatprep.subr.mxu0 %v949
    %2207 = vmatpush1.msra.mxu0 %v948
    %2208 = vmatprep.subr.mxu0 %v945
    %2209 = vmatpush1.msra.mxu0 %v944
    %2210 = vmatprep.subr.mxu0 %v941
    %2211 = vmatpush1.msra.mxu0 %v940
    %2212 = vmatprep.subr.mxu0 %v937
    %2213 = vmatpush1.msra.mxu0 %v936
    %2214 = vmatprep.subr.mxu0 %v933
    %2215 = vmatpush1.msra.mxu0 %v932
    %2216 = vmatprep.subr.mxu0 %v929
    %2217 = vmatpush1.msra.mxu0 %v928
    %2218 = vmatprep.subr.mxu0 %v925
    %2219 = vmatpush1.msra.mxu0 %v924
    %2220 = vmatprep.subr.mxu0 %v921
    %2221 = vmatpush1.msra.mxu0 %v920
    %2222 = vmatprep.subr.mxu0 %v917
    %2223 = vmatpush1.msra.mxu0 %v916
    %2224 = vmatprep.subr.mxu0 %v913
    %2225 = vmatpush1.msra.mxu0 %v912
    %2226 = vmatprep.subr.mxu0 %v909
    %2227 = vmatpush1.msra.mxu0 %v908
    %2228 = vmatprep.subr.mxu0 %v905
    %2229 = vmatpush1.msra.mxu0 %v904
    %2230 = vmatprep.subr.mxu0 %v901
    %2231 = vmatpush1.msra.mxu0 %v900
    %2232 = vmatprep.subr.mxu0 %v897
    %2233 = vmatpush1.msra.mxu0 %v896
    %2234 = vmatprep.subr.mxu0 0.0
    %2235 = vmatpush2.msra.mxu0 0.0
    %2236 = vmatprep.subr.mxu0 0.0
    %2237 = vmatpush2.msra.mxu0 0.0
    %2238 = vmatprep.subr.mxu0 0.0
    %2239 = vmatpush2.msra.mxu0 0.0
    %2240 = vmatprep.subr.mxu0 0.0
    %2241 = vmatpush2.msra.mxu0 0.0
    %2242 = vmatprep.subr.mxu0 0.0
    %2243 = vmatpush2.msra.mxu0 0.0
    %2244 = vmatprep.subr.mxu0 0.0
    %2245 = vmatpush2.msra.mxu0 0.0
    %2246 = vmatprep.subr.mxu0 0.0
    %2247 = vmatpush2.msra.mxu0 0.0
    %2248 = vmatprep.subr.mxu0 0.0
    %2249 = vmatpush2.msra.mxu0 0.0
    %2250 = vmatprep.subr.mxu0 0.0
    %2251 = vmatpush2.msra.mxu0 0.0
    %2252 = vmatprep.subr.mxu0 0.0
    %2253 = vmatpush2.msra.mxu0 0.0
    %2254 = vmatprep.subr.mxu0 0.0
    %2255 = vmatpush2.msra.mxu0 0.0
    %2256 = vmatprep.subr.mxu0 0.0
    %2257 = vmatpush2.msra.mxu0 0.0
    %2258 = vmatprep.subr.mxu0 0.0
    %2259 = vmatpush2.msra.mxu0 0.0
    %2260 = vmatprep.subr.mxu0 0.0
    %2261 = vmatpush2.msra.mxu0 0.0
    %2262 = vmatprep.subr.mxu0 0.0
    %2263 = vmatpush2.msra.mxu0 0.0
    %2264 = vmatprep.subr.mxu0 0.0
    %2265 = vmatpush2.msra.mxu0 0.0
    %2266 = vmatprep.mubr.f32.mxu0 0.0
    %2267 = vmatmul.mubr.f32.gmra.mxu0 %v2200
    %v2268 = vpop.f32.mrf.mxu0
    %v2269 = vadd.f32 0.0, %v2268
    %v2270 = vpop.f32.mrf.mxu0
    %v2271 = vadd.f32 0.0, %v2270
    %2272 = vdwg.mxu0
    %2273 = vmatprep.subr.mxu0 %v959
    %2274 = vmatpush1.msra.mxu0 %v958
    %2275 = vmatprep.subr.mxu0 %v955
    %2276 = vmatpush1.msra.mxu0 %v954
    %2277 = vmatprep.subr.mxu0 %v951
    %2278 = vmatpush1.msra.mxu0 %v950
    %2279 = vmatprep.subr.mxu0 %v947
    %2280 = vmatpush1.msra.mxu0 %v946
    %2281 = vmatprep.subr.mxu0 %v943
    %2282 = vmatpush1.msra.mxu0 %v942
    %2283 = vmatprep.subr.mxu0 %v939
    %2284 = vmatpush1.msra.mxu0 %v938
    %2285 = vmatprep.subr.mxu0 %v935
    %2286 = vmatpush1.msra.mxu0 %v934
    %2287 = vmatprep.subr.mxu0 %v931
    %2288 = vmatpush1.msra.mxu0 %v930
    %2289 = vmatprep.subr.mxu0 %v927
    %2290 = vmatpush1.msra.mxu0 %v926
    %2291 = vmatprep.subr.mxu0 %v923
    %2292 = vmatpush1.msra.mxu0 %v922
    %2293 = vmatprep.subr.mxu0 %v919
    %2294 = vmatpush1.msra.mxu0 %v918
    %2295 = vmatprep.subr.mxu0 %v915
    %2296 = vmatpush1.msra.mxu0 %v914
    %2297 = vmatprep.subr.mxu0 %v911
    %2298 = vmatpush1.msra.mxu0 %v910
    %2299 = vmatprep.subr.mxu0 %v907
    %2300 = vmatpush1.msra.mxu0 %v906
    %2301 = vmatprep.subr.mxu0 %v903
    %2302 = vmatpush1.msra.mxu0 %v902
    %2303 = vmatprep.subr.mxu0 %v899
    %2304 = vmatpush1.msra.mxu0 %v898
    %2305 = vmatprep.subr.mxu0 0.0
    %2306 = vmatpush2.msra.mxu0 0.0
    %2307 = vmatprep.subr.mxu0 0.0
    %2308 = vmatpush2.msra.mxu0 0.0
    %2309 = vmatprep.subr.mxu0 0.0
    %2310 = vmatpush2.msra.mxu0 0.0
    %2311 = vmatprep.subr.mxu0 0.0
    %2312 = vmatpush2.msra.mxu0 0.0
    %2313 = vmatprep.subr.mxu0 0.0
    %2314 = vmatpush2.msra.mxu0 0.0
    %2315 = vmatprep.subr.mxu0 0.0
    %2316 = vmatpush2.msra.mxu0 0.0
    %2317 = vmatprep.subr.mxu0 0.0
    %2318 = vmatpush2.msra.mxu0 0.0
    %2319 = vmatprep.subr.mxu0 0.0
    %2320 = vmatpush2.msra.mxu0 0.0
    %2321 = vmatprep.subr.mxu0 0.0
    %2322 = vmatpush2.msra.mxu0 0.0
    %2323 = vmatprep.subr.mxu0 0.0
    %2324 = vmatpush2.msra.mxu0 0.0
    %2325 = vmatprep.subr.mxu0 0.0
    %2326 = vmatpush2.msra.mxu0 0.0
    %2327 = vmatprep.subr.mxu0 0.0
    %2328 = vmatpush2.msra.mxu0 0.0
    %2329 = vmatprep.subr.mxu0 0.0
    %2330 = vmatpush2.msra.mxu0 0.0
    %2331 = vmatprep.subr.mxu0 0.0
    %2332 = vmatpush2.msra.mxu0 0.0
    %2333 = vmatprep.subr.mxu0 0.0
    %2334 = vmatpush2.msra.mxu0 0.0
    %2335 = vmatprep.subr.mxu0 0.0
    %2336 = vmatpush2.msra.mxu0 0.0
    %2337 = vmatprep.mubr.f32.mxu0 0.0
    %2338 = vmatmul.mubr.f32.gmra.mxu0 %v2200
    %v2339 = vpop.f32.mrf.mxu0
    %v2340 = vadd.f32 0.0, %v2339
    %v2341 = vpop.f32.mrf.mxu0
    %v2342 = vadd.f32 0.0, %v2341
    %2343 = vdwg.mxu0
    %v2348 = vrot.slane %v2269, 2
    %v2349 = vrot.slane %v2271, 2
    %v2350 = vrot.slane %v2340, 2
    %v2351 = vrot.slane %v2342, 2
    %v2356 = vadd.f32 %v892, %v2348
    %v2357 = vadd.f32 %v893, %v2349
    %v2358 = vadd.f32 %v894, %v2350
    %v2359 = vadd.f32 %v895, %v2351
    %v2360 = vxor.u32 %v2356, 2147483648
    %v2361 = vmul.f32 %v2360, 1.442695
    %v2362 = vpow.pop %v2361
    %v2363 = vadd.f32 %v2362, 1.0
    %v2364 = vrcp.pop %v2363
    %v2365 = vmul.f32 1.0, %v2364
    %v2366 = vxor.u32 %v2357, 2147483648
    %v2367 = vmul.f32 %v2366, 1.442695
    %v2368 = vpow.pop %v2367
    %v2369 = vadd.f32 %v2368, 1.0
    %v2370 = vrcp.pop %v2369
    %v2371 = vmul.f32 1.0, %v2370
    %v2372 = vmul.f32 %v2365, %v2359
    %v2373 = vadd.f32 %v2358, %v2372
    %v2374 = vtanh.pop %v2373
    %v2375 = vsub.f32 1.0, %v2371
    %v2376 = vmul.f32 %v2375, %v2374
    %v2377 = vrot.slane %v2198, 6
    %v2379 = vmul.f32 %v2371, %v2377
    %v2380 = vadd.f32 %v2376, %v2379
    %v2381 = vld [vmem:[%s5] sm:$0xff]
    %v2382 = vld [vmem:[%s5 + $0x8] sm:$0xff]
    %v2383 = vld [vmem:[%s5 + $0x10] sm:$0xff]
    %v2384 = vld [vmem:[%s5 + $0x18] sm:$0xff]
    %v2385 = vld [vmem:[%s5 + $0x20] sm:$0xff]
    %v2386 = vld [vmem:[%s5 + $0x28] sm:$0xff]
    %v2387 = vld [vmem:[%s5 + $0x30] sm:$0xff]
    %v2388 = vld [vmem:[%s5 + $0x38] sm:$0xff]
    %v2389 = vld [vmem:[%s5 + $0x40] sm:$0xff]
    %v2390 = vld [vmem:[%s5 + $0x48] sm:$0xff]
    %v2391 = vld [vmem:[%s5 + $0x50] sm:$0xff]
    %v2392 = vld [vmem:[%s5 + $0x58] sm:$0xff]
    %v2393 = vld [vmem:[%s5 + $0x60] sm:$0xff]
    %v2394 = vld [vmem:[%s5 + $0x68] sm:$0xff]
    %v2395 = vld [vmem:[%s5 + $0x70] sm:$0xff]
    %v2396 = vld [vmem:[%s5 + $0x78] sm:$0xff]
    %v2397 = vld [vmem:[%s6] sm:$0x1]
    %v2399 = vlaneseq
    %v2400 = vshrl.u32 %v2399, 7
    %v2401 = vsub.s32 0, %v2400
    %v2402 = vrot.slane %v2397, %v2401
    %v2405 = vrot.slane %v2380, 6
    %2407 = vmatprep.subr.mxu0 0.0
    %2408 = vmatpush1.msra.mxu0 %v2396
    %2409 = vmatprep.subr.mxu0 0.0
    %2410 = vmatpush1.msra.mxu0 %v2395
    %2411 = vmatprep.subr.mxu0 0.0
    %2412 = vmatpush1.msra.mxu0 %v2394
    %2413 = vmatprep.subr.mxu0 0.0
    %2414 = vmatpush1.msra.mxu0 %v2393
    %2415 = vmatprep.subr.mxu0 0.0
    %2416 = vmatpush1.msra.mxu0 %v2392
    %2417 = vmatprep.subr.mxu0 0.0
    %2418 = vmatpush1.msra.mxu0 %v2391
    %2419 = vmatprep.subr.mxu0 0.0
    %2420 = vmatpush1.msra.mxu0 %v2390
    %2421 = vmatprep.subr.mxu0 0.0
    %2422 = vmatpush1.msra.mxu0 %v2389
    %2423 = vmatprep.subr.mxu0 0.0
    %2424 = vmatpush1.msra.mxu0 %v2388
    %2425 = vmatprep.subr.mxu0 0.0
    %2426 = vmatpush1.msra.mxu0 %v2387
    %2427 = vmatprep.subr.mxu0 0.0
    %2428 = vmatpush1.msra.mxu0 %v2386
    %2429 = vmatprep.subr.mxu0 0.0
    %2430 = vmatpush1.msra.mxu0 %v2385
    %2431 = vmatprep.subr.mxu0 0.0
    %2432 = vmatpush1.msra.mxu0 %v2384
    %2433 = vmatprep.subr.mxu0 0.0
    %2434 = vmatpush1.msra.mxu0 %v2383
    %2435 = vmatprep.subr.mxu0 0.0
    %2436 = vmatpush1.msra.mxu0 %v2382
    %2437 = vmatprep.subr.mxu0 0.0
    %2438 = vmatpush1.msra.mxu0 %v2381
    %2439 = vmatprep.subr.mxu0 0.0
    %2440 = vmatpush2.msra.mxu0 0.0
    %2441 = vmatprep.subr.mxu0 0.0
    %2442 = vmatpush2.msra.mxu0 0.0
    %2443 = vmatprep.subr.mxu0 0.0
    %2444 = vmatpush2.msra.mxu0 0.0
    %2445 = vmatprep.subr.mxu0 0.0
    %2446 = vmatpush2.msra.mxu0 0.0
    %2447 = vmatprep.subr.mxu0 0.0
    %2448 = vmatpush2.msra.mxu0 0.0
    %2449 = vmatprep.subr.mxu0 0.0
    %2450 = vmatpush2.msra.mxu0 0.0
    %2451 = vmatprep.subr.mxu0 0.0
    %2452 = vmatpush2.msra.mxu0 0.0
    %2453 = vmatprep.subr.mxu0 0.0
    %2454 = vmatpush2.msra.mxu0 0.0
    %2455 = vmatprep.subr.mxu0 0.0
    %2456 = vmatpush2.msra.mxu0 0.0
    %2457 = vmatprep.subr.mxu0 0.0
    %2458 = vmatpush2.msra.mxu0 0.0
    %2459 = vmatprep.subr.mxu0 0.0
    %2460 = vmatpush2.msra.mxu0 0.0
    %2461 = vmatprep.subr.mxu0 0.0
    %2462 = vmatpush2.msra.mxu0 0.0
    %2463 = vmatprep.subr.mxu0 0.0
    %2464 = vmatpush2.msra.mxu0 0.0
    %2465 = vmatprep.subr.mxu0 0.0
    %2466 = vmatpush2.msra.mxu0 0.0
    %2467 = vmatprep.subr.mxu0 0.0
    %2468 = vmatpush2.msra.mxu0 0.0
    %2469 = vmatprep.subr.mxu0 0.0
    %2470 = vmatpush2.msra.mxu0 0.0
    %2471 = vmatprep.mubr.f32.mxu0 0.0
    %2472 = vmatmul.mubr.f32.gmra.mxu0 %v2405
    %v2473 = vpop.f32.mrf.mxu0
    %v2474 = vadd.f32 %v2402, %v2473
    %v2475 = vpop.f32.mrf.mxu0
    %2476 = vdwg.mxu0
    %vm2477 = vcmask 254976
    %2478 = vst.msk [vmem:[#allocation7] sm:$0x3] %vm2477, %v2474
    // Predicated region
    $region38: #{tpu_custom_call.1} parent=1 // pred_check
      _
    $region39: #{tpu_custom_call.1} parent=1 // pred_check_branch
      %2480 = sbr.rel (0) target = $region41
    $region40: #{tpu_custom_call.1} parent=1 // pred_region
      %s2482 = ssub.s32 32, 32
      %2483 = vsyncadd [#allocation4], %s2482
      %s2485 = sshll.u32 [#allocation7], 4
      %s2486 = int_to_ptr.vmem [resolvable:$true] %s2485
      %2488 = dma.vmem_to_hbm [thread:$0]  %s2486, 32, %s7, [#allocation4]
    $region41: #{tpu_custom_call.1} parent=1 // pred_fallthru
      _
    // Predicated region
    $region42: #{tpu_custom_call.1} parent=1 // pred_check
      _
    $region43: #{tpu_custom_call.1} parent=1 // pred_check_branch
      %2490 = sbr.rel (0) target = $region45
    $region44: #{tpu_custom_call.1} parent=1 // pred_region
      %2491 = dma.done [#allocation4], 32
    $region45: #{tpu_custom_call.1} parent=1 // pred_fallthru
      _
    %2492 = vsyncpa [#allocation3], 1
    %2493 = vsyncpa [#allocation6], 1
    %2494 = vsyncpa [#allocation4], 1

</llo_original>
